<compile_context>
chip_gen: v5e
topology: v5e:2x2
jax: 0.10.0
libtpu: 0.0.40
codegen_flags: <defaults>
</compile_context>

<pallas_src>
import functools

import jax
import jax.numpy as jnp
from jax import lax
from jax.experimental import pallas as pl
from jax.experimental.pallas import tpu as pltpu

ATT = 49        # attention dim hard-coded in the module (W_v/W_g/W_s -> 49, W_h: 49 -> 1)
ATT_PAD = 128   # lane-dense padding of the attention dim


def _largest_divisor_leq(n, cap):
    for d in range(min(n, cap), 0, -1):
        if n % d == 0:
            return d
    return 1


def atten_kernel(v_ref, s_ref, h_ref, wvt_ref, wgt_ref, wh_ref, out_ref,
                 *, t_chunk, compute_dtype):
    bb, K, H = v_ref.shape
    T = s_ref.shape[1]
    AP = wvt_ref.shape[1]
    n_chunks = T // t_chunk

    wv_t = wvt_ref[...]                       # (H, AP)  W_v^T zero-padded to 128 lanes
    wg_t = wgt_ref[...]                       # (H, AP)  W_g^T zero-padded
    wh_row = wh_ref[...].astype(jnp.float32)[0]   # (AP,)  W_h zero-padded

    # V is reused for the projection and for alpha @ V; keep native dtype for MXU.
    V = v_ref[...]                            # (bb, K, H)

    # Stacked projection across all fused batches (one MXU pass), f32 accumulate.
    wv_V = jnp.dot(V.reshape(bb * K, H), wv_t,
                   preferred_element_type=jnp.float32)         # (bb*K, AP)
    wv_V = wv_V.astype(compute_dtype).reshape(bb, 1, K, AP)

    def chunk_body(c, carry):
        t0 = pl.multiple_of(c * t_chunk, t_chunk)
        h_c = h_ref[:, pl.ds(t0, t_chunk), :]                  # (bb, Tc, H) native
        s_c = s_ref[:, pl.ds(t0, t_chunk), :].astype(jnp.float32)

        wg_h = jnp.dot(h_c.reshape(bb * t_chunk, H), wg_t,
                       preferred_element_type=jnp.float32)     # (bb*Tc, AP)
        wg_h = wg_h.astype(compute_dtype).reshape(bb, t_chunk, 1, AP)

        # z = tanh(W_v(V)[b,None,k,:] + W_g(h_t)[b,t,None,:])  -> (bb, Tc, K, AP)
        z = jnp.tanh(wv_V + wg_h)

        # W_h(z).squeeze(-1): padded lanes of wh are exactly zero, so this full
        # 128-wide lane reduce equals the original 49-wide contraction. f32.
        z_t = jnp.sum(z * wh_row, axis=-1)                     # (bb, Tc, K)

        # softmax over spatial regions K (exact divide; denominator is tiny).
        z_max = jnp.max(z_t, axis=-1, keepdims=True)
        e = jnp.exp(z_t - z_max)
        alpha = e / jnp.sum(e, axis=-1, keepdims=True)         # (bb, Tc, K)

        # c_t = bmm(alpha, V) for this T-chunk, accumulated in f32.
        c_t = jnp.einsum("btk,bkh->bth", alpha, V,
                         preferred_element_type=jnp.float32)   # (bb, Tc, H)

        # NOTE: the PyTorch forward also builds hat_z = W_h(tanh(W_s(s_t)+W_g(h_t)))
        # and hat_alpha = softmax(cat(z_t, hat_z)), but the returned hat_c uses
        # beta = alpha[:, :, -1] (per the given source), so that branch never
        # reaches the output and is omitted from the hot path.
        # TODO(synk): hat_alpha / W_s branch intentionally not emitted (dead code
        # w.r.t. the returned hat_c in the provided module source).
        beta = alpha[:, :, K - 1:K]                            # (bb, Tc, 1)
        hat_c = beta * s_c + (1.0 - beta) * c_t                # (bb, Tc, H)

        out_ref[:, pl.ds(t0, t_chunk), :] = hat_c.astype(out_ref.dtype)
        return carry

    lax.fori_loop(0, n_chunks, chunk_body, 0, unroll=(n_chunks <= 8))


def prepare_atten_weights(wv, wg, wh, dtype=None):
    """Pre-transpose + zero-pad weights to lane-dense (..., 128) layouts.

    Call ONCE at module init and reuse the result every forward call (hoisted
    out of the per-call path per the performance review)."""
    dtype = dtype or wv.dtype
    A, H = wv.shape
    wv_t = jnp.zeros((H, ATT_PAD), dtype).at[:, :A].set(wv.T.astype(dtype))
    wg_t = jnp.zeros((H, ATT_PAD), dtype).at[:, :A].set(wg.T.astype(dtype))
    wh_p = jnp.zeros((1, ATT_PAD), dtype).at[:, :wh.shape[1]].set(wh.astype(dtype))
    return wv_t, wg_t, wh_p


def atten_pallas(V, s_t, h_t, wv_t, wg_t, wh_p, *, batch_block=None, t_chunk=None,
                 compute_dtype=None, interpret=False):
    """Atten.forward.  Expects weights already prepared by prepare_atten_weights.
    W_s is dead code w.r.t. the returned hat_c, so it is never passed / DMA'd."""
    B, K, H = V.shape
    T = s_t.shape[1]
    dt = V.dtype
    db = jnp.dtype(dt).itemsize
    # bf16 inputs -> bf16 add+tanh (native on v6e/v7x EUP/VPU); f32 inputs -> f32.
    compute_dtype = compute_dtype or dt
    cdb = jnp.dtype(compute_dtype).itemsize

    if t_chunk is None:
        t_chunk = _largest_divisor_leq(T, 8)
    assert T % t_chunk == 0, "t_chunk must divide T"

    def footprint(bb):
        io = bb * (K * H + 3 * T * H) * db * 2                 # in+out blocks, double-buffered
        weights = (2 * H * ATT_PAD + ATT_PAD) * jnp.dtype(wv_t.dtype).itemsize
        z_live = bb * t_chunk * K * ATT_PAD * cdb              # live z chunk
        proj = bb * (K + t_chunk) * ATT_PAD * 4                # wv_V + wg_h (f32)
        return io + weights + 2 * (z_live + proj)

    if batch_block is None:
        # >= 4 grid steps when possible: gives DMA/compute overlap via
        # double-buffering and keeps both v7x TensorCores busy ("parallel" axis),
        # while staying inside a conservative VMEM budget (v7x: 64 MiB physical).
        target_nb = min(B, 4)
        budget = 24 * 1024 * 1024
        batch_block = 1
        for bb in range(1, B + 1):
            if B % bb:
                continue
            if B // bb < target_nb:
                continue
            if footprint(bb) > budget:
                continue
            batch_block = bb
    assert B % batch_block == 0, "batch_block must divide B"
    nb = B // batch_block

    vmem_limit = int(min(max(2 * footprint(batch_block), 16 * 1024 * 1024),
                         64 * 1024 * 1024))

    kernel = functools.partial(atten_kernel, t_chunk=t_chunk,
                               compute_dtype=compute_dtype)

    return pl.pallas_call(
        kernel,
        out_shape=jax.ShapeDtypeStruct((B, T, H), dt),
        grid=(nb,),
        in_specs=[
            pl.BlockSpec((batch_block, K, H), lambda i: (i, 0, 0)),   # V
            pl.BlockSpec((batch_block, T, H), lambda i: (i, 0, 0)),   # s_t
            pl.BlockSpec((batch_block, T, H), lambda i: (i, 0, 0)),   # h_t
            pl.BlockSpec((H, ATT_PAD), lambda i: (0, 0)),             # W_v^T (padded)
            pl.BlockSpec((H, ATT_PAD), lambda i: (0, 0)),             # W_g^T (padded)
            pl.BlockSpec((1, ATT_PAD), lambda i: (0, 0)),             # W_h   (padded)
        ],
        out_specs=pl.BlockSpec((batch_block, T, H), lambda i: (i, 0, 0)),
        compiler_params=pltpu.CompilerParams(
            dimension_semantics=("parallel",),
            vmem_limit_bytes=vmem_limit,
        ),
        interpret=interpret,
    )(V, s_t, h_t, wv_t, wg_t, wh_p)


def atten_ref(V, s_t, h_t, wv, wg, wh):
    """Pure-JAX reference mirroring the PyTorch forward (returned value only)."""
    wv_V = jnp.einsum("bkh,ah->bka", V, wv)                    # (B, K, 49)
    wg_h = jnp.einsum("bth,ah->bta", h_t, wg)                  # (B, T, 49)
    z = jnp.tanh(wv_V[:, None, :, :] + wg_h[:, :, None, :])    # (B, T, K, 49)
    z_t = jnp.einsum("btka,a->btk", z, wh[0])                  # (B, T, K)
    alpha = jax.nn.softmax(z_t, axis=-1)                       # softmax over K
    c_t = jnp.einsum("btk,bkh->bth", alpha, V)                 # (B, T, H)
    beta = alpha[..., -1:]                                     # (B, T, 1)
    return beta * s_t + (1.0 - beta) * c_t


if __name__ == "__main__":
    B, T, K, H = 2, 8, 8, 32
    key = jax.random.PRNGKey(0)
    ks = jax.random.split(key, 7)

    V = jax.random.normal(ks[0], (B, K, H), jnp.float32)
    s_t = jax.random.normal(ks[1], (B, T, H), jnp.float32)
    h_t = jax.random.normal(ks[2], (B, T, H), jnp.float32)

    # Deterministic parameter init (PyTorch Linear-style uniform(-1/sqrt(fan_in), ...))
    sH = 1.0 / (H ** 0.5)
    sA = 1.0 / (ATT ** 0.5)
    wv = jax.random.uniform(ks[3], (ATT, H), jnp.float32, -sH, sH)
    wg = jax.random.uniform(ks[4], (ATT, H), jnp.float32, -sH, sH)
    wh = jax.random.uniform(ks[5], (1, ATT), jnp.float32, -sA, sA)
    ws = jax.random.uniform(ks[6], (ATT, H), jnp.float32, -sH, sH)  # dead w.r.t. hat_c
    del ws

    # Weight padding hoisted: prepare once, reuse every forward call.
    wv_t, wg_t, wh_p = prepare_atten_weights(wv, wg, wh, jnp.float32)

    out = atten_pallas(V, s_t, h_t, wv_t, wg_t, wh_p)
    jax.block_until_ready(out)

    ref = atten_ref(V, s_t, h_t, wv, wg, wh)
    assert out.shape == (B, T, H)
    assert jnp.allclose(out, ref, atol=1e-4, rtol=1e-4), "mismatch vs JAX reference"

    print("KERNEL_OK")
</pallas_src>

<mosaic_0001>
module attributes {stable_mosaic.version = 11 : i64} {
  func.func @atten_kernel(%arg0: i32, %arg1: memref<1x8x32xf32, #tpu.memory_space<vmem>>, %arg2: memref<1x8x32xf32, #tpu.memory_space<vmem>>, %arg3: memref<1x8x32xf32, #tpu.memory_space<vmem>>, %arg4: memref<32x128xf32, #tpu.memory_space<vmem>>, %arg5: memref<32x128xf32, #tpu.memory_space<vmem>>, %arg6: memref<1x128xf32, #tpu.memory_space<vmem>>, %arg7: memref<1x8x32xf32, #tpu.memory_space<vmem>>) attributes {dimension_semantics = [#tpu.dimension_semantics<parallel>], iteration_bounds = array<i64: 2>, scalar_prefetch = 0 : i64, scratch_operands = 0 : i64, tpu.core_type = #tpu.core_type<tc>, window_params = [{transform_indices = @transform_0, window_bounds = array<i64: 1, 8, 32>}, {transform_indices = @transform_1, window_bounds = array<i64: 1, 8, 32>}, {transform_indices = @transform_2, window_bounds = array<i64: 1, 8, 32>}, {pipeline_mode = #tpu.pipeline_mode<synchronous>, transform_indices = @transform_3, window_bounds = array<i64: 32, 128>}, {pipeline_mode = #tpu.pipeline_mode<synchronous>, transform_indices = @transform_4, window_bounds = array<i64: 32, 128>}, {pipeline_mode = #tpu.pipeline_mode<synchronous>, transform_indices = @transform_5, window_bounds = array<i64: 1, 128>}, {transform_indices = @transform_6, window_bounds = array<i64: 1, 8, 32>}]} {
    %c0 = arith.constant 0 : index
    %c0_0 = arith.constant 0 : index
    %0 = vector.load %arg4[%c0, %c0_0] : memref<32x128xf32, #tpu.memory_space<vmem>>, vector<32x128xf32>
    %c0_1 = arith.constant 0 : index
    %c0_2 = arith.constant 0 : index
    %1 = vector.load %arg5[%c0_1, %c0_2] : memref<32x128xf32, #tpu.memory_space<vmem>>, vector<32x128xf32>
    %c0_3 = arith.constant 0 : index
    %c0_4 = arith.constant 0 : index
    %2 = vector.load %arg6[%c0_3, %c0_4] : memref<1x128xf32, #tpu.memory_space<vmem>>, vector<1x128xf32>
    %3 = vector.shape_cast %2 : vector<1x128xf32> to vector<128xf32>
    %c0_5 = arith.constant 0 : index
    %c0_6 = arith.constant 0 : index
    %c0_7 = arith.constant 0 : index
    %4 = vector.load %arg1[%c0_5, %c0_6, %c0_7] : memref<1x8x32xf32, #tpu.memory_space<vmem>>, vector<1x8x32xf32>
    %5 = vector.shape_cast %4 : vector<1x8x32xf32> to vector<8x32xf32>
    %cst = arith.constant dense<0.000000e+00> : vector<8x128xf32>
    %6 = tpu.matmul %5, %0, %cst {dimension_numbers = #tpu.dot_dimension_numbers<[1], [0], [0], [1], [0, 0, 1, 1], [], []>} : vector<8x32xf32>, vector<32x128xf32>, vector<8x128xf32> -> vector<8x128xf32>
    %7 = vector.shape_cast %6 : vector<8x128xf32> to vector<1x1x8x128xf32>
    %c0_i32 = arith.constant 0 : i32
    %c8_i32 = arith.constant 8 : i32
    %8 = arith.muli %c0_i32, %c8_i32 : i32
    %9 = tpu.assume_multiple %8, 8 : i32
    %c0_8 = arith.constant 0 : index
    %10 = arith.index_cast %9 : i32 to index
    %c0_9 = arith.constant 0 : index
    %11 = vector.load %arg3[%c0_8, %10, %c0_9] : memref<1x8x32xf32, #tpu.memory_space<vmem>>, vector<1x8x32xf32>
    %c0_10 = arith.constant 0 : index
    %12 = arith.index_cast %9 : i32 to index
    %c0_11 = arith.constant 0 : index
    %13 = vector.load %arg2[%c0_10, %12, %c0_11] : memref<1x8x32xf32, #tpu.memory_space<vmem>>, vector<1x8x32xf32>
    %14 = vector.shape_cast %11 : vector<1x8x32xf32> to vector<8x32xf32>
    %cst_12 = arith.constant dense<0.000000e+00> : vector<8x128xf32>
    %15 = tpu.matmul %14, %1, %cst_12 {dimension_numbers = #tpu.dot_dimension_numbers<[1], [0], [0], [1], [0, 0, 1, 1], [], []>} : vector<8x32xf32>, vector<32x128xf32>, vector<8x128xf32> -> vector<8x128xf32>
    %16 = vector.shape_cast %15 : vector<8x128xf32> to vector<1x8x1x128xf32>
    %17 = vector.broadcast %7 : vector<1x1x8x128xf32> to vector<1x8x8x128xf32>
    %18 = vector.broadcast %16 : vector<1x8x1x128xf32> to vector<1x8x8x128xf32>
    %19 = arith.addf %17, %18 : vector<1x8x8x128xf32>
    %20 = math.tanh %19 : vector<1x8x8x128xf32>
    %21 = vector.shape_cast %3 : vector<128xf32> to vector<1x1x1x128xf32>
    %22 = vector.broadcast %21 : vector<1x1x1x128xf32> to vector<1x8x8x128xf32>
    %23 = arith.mulf %20, %22 : vector<1x8x8x128xf32>
    %cst_13 = arith.constant dense<0.000000e+00> : vector<1x8x8xf32>
    %24 = vector.multi_reduction <add>, %23, %cst_13 [3] : vector<1x8x8x128xf32> to vector<1x8x8xf32>
    %cst_14 = arith.constant dense<0xFF800000> : vector<1x8xf32>
    %25 = vector.multi_reduction <maximumf>, %24, %cst_14 [2] : vector<1x8x8xf32> to vector<1x8xf32>
    %26 = vector.shape_cast %25 : vector<1x8xf32> to vector<1x8x1xf32>
    %27 = vector.broadcast %26 : vector<1x8x1xf32> to vector<1x8x8xf32>
    %28 = arith.subf %24, %27 : vector<1x8x8xf32>
    %29 = math.exp %28 : vector<1x8x8xf32>
    %cst_15 = arith.constant dense<0.000000e+00> : vector<1x8xf32>
    %30 = vector.multi_reduction <add>, %29, %cst_15 [2] : vector<1x8x8xf32> to vector<1x8xf32>
    %31 = vector.shape_cast %30 : vector<1x8xf32> to vector<1x8x1xf32>
    %32 = vector.broadcast %31 : vector<1x8x1xf32> to vector<1x8x8xf32>
    %33 = arith.divf %29, %32 : vector<1x8x8xf32>
    "tpu.trace_start"() <{level = 10 : i32, message = "btk,bkh->bth"}> : () -> ()
    %cst_16 = arith.constant dense<0.000000e+00> : vector<1x8x32xf32>
    %34 = tpu.matmul %33, %4, %cst_16 {dimension_numbers = #tpu.dot_dimension_numbers<[2], [1], [1], [2], [0, 0, 0, 1, 1, 2], [0], [0]>} : vector<1x8x8xf32>, vector<1x8x32xf32>, vector<1x8x32xf32> -> vector<1x8x32xf32>
    "tpu.trace_stop"() : () -> ()
    %35 = vector.extract_strided_slice %33 {offsets = [0, 0, 7], sizes = [1, 8, 1], strides = [1, 1, 1]} : vector<1x8x8xf32> to vector<1x8x1xf32>
    %36 = vector.broadcast %35 : vector<1x8x1xf32> to vector<1x8x32xf32>
    %37 = arith.mulf %36, %13 : vector<1x8x32xf32>
    %cst_17 = arith.constant 1.000000e+00 : f32
    %38 = vector.broadcast %cst_17 : f32 to vector<1x8x1xf32>
    %39 = arith.subf %38, %35 : vector<1x8x1xf32>
    %40 = vector.broadcast %39 : vector<1x8x1xf32> to vector<1x8x32xf32>
    %41 = arith.mulf %40, %34 : vector<1x8x32xf32>
    %42 = arith.addf %37, %41 : vector<1x8x32xf32>
    %c0_18 = arith.constant 0 : index
    %43 = arith.index_cast %9 : i32 to index
    %c0_19 = arith.constant 0 : index
    %44 = vector.load %arg7[%c0_18, %43, %c0_19] : memref<1x8x32xf32, #tpu.memory_space<vmem>>, vector<1x8x32xf32>
    tpu.vector_store %arg7[%c0_18, %43, %c0_19], %42 {strides = array<i32>} : memref<1x8x32xf32, #tpu.memory_space<vmem>>, vector<1x8x32xf32>,
    %c1_i32 = arith.constant 1 : i32
    return
  }
  func.func @transform_0(%arg0: i32) -> (i32, i32, i32) {
    %c0_i32 = arith.constant 0 : i32
    %c0_i32_0 = arith.constant 0 : i32
    %c0_i32_1 = arith.constant 0 : i32
    return %arg0, %c0_i32, %c0_i32_0 : i32, i32, i32
  }
  func.func @transform_1(%arg0: i32) -> (i32, i32, i32) {
    %c0_i32 = arith.constant 0 : i32
    %c0_i32_0 = arith.constant 0 : i32
    %c0_i32_1 = arith.constant 0 : i32
    return %arg0, %c0_i32, %c0_i32_0 : i32, i32, i32
  }
  func.func @transform_2(%arg0: i32) -> (i32, i32, i32) {
    %c0_i32 = arith.constant 0 : i32
    %c0_i32_0 = arith.constant 0 : i32
    %c0_i32_1 = arith.constant 0 : i32
    return %arg0, %c0_i32, %c0_i32_0 : i32, i32, i32
  }
  func.func @transform_3(%arg0: i32) -> (i32, i32) {
    %c0_i32 = arith.constant 0 : i32
    %c0_i32_0 = arith.constant 0 : i32
    %c0_i32_1 = arith.constant 0 : i32
    return %c0_i32, %c0_i32_0 : i32, i32
  }
  func.func @transform_4(%arg0: i32) -> (i32, i32) {
    %c0_i32 = arith.constant 0 : i32
    %c0_i32_0 = arith.constant 0 : i32
    %c0_i32_1 = arith.constant 0 : i32
    return %c0_i32, %c0_i32_0 : i32, i32
  }
  func.func @transform_5(%arg0: i32) -> (i32, i32) {
    %c0_i32 = arith.constant 0 : i32
    %c0_i32_0 = arith.constant 0 : i32
    %c0_i32_1 = arith.constant 0 : i32
    return %c0_i32, %c0_i32_0 : i32, i32
  }
  func.func @transform_6(%arg0: i32) -> (i32, i32, i32) {
    %c0_i32 = arith.constant 0 : i32
    %c0_i32_0 = arith.constant 0 : i32
    %c0_i32_1 = arith.constant 0 : i32
    return %arg0, %c0_i32, %c0_i32_0 : i32, i32, i32
  }
}

</mosaic_0001>

<llo_original>
// kernel: tpu_custom_call.1
$region0: #{tpu_custom_call.1}
  #allocation0 [shape = 'u32[]', space=smem, size = 0x4, offset = 0x4, fixed_abs, tag = 'smem constant byte address 0x4 - core index']
  #allocation1 [shape = 'u32[72,128]{1,0:T(1,128)}', space=vmem, size = 0x9000, scoped, tag = 'internal scratch']
  %s0 = inlined_call_operand.hbm [shape: f32[2,8,32], index: 0, kind: input, shape index: {}]
  %s1 = inlined_call_operand.hbm [shape: f32[2,8,32], index: 1, kind: input, shape index: {}]
  %s2 = inlined_call_operand.hbm [shape: f32[2,8,32], index: 2, kind: input, shape index: {}]
  %s3 = inlined_call_operand.hbm [shape: f32[32,128], index: 3, kind: input, shape index: {}]
  %s4 = inlined_call_operand.hbm [shape: f32[32,128], index: 4, kind: input, shape index: {}]
  %s5 = inlined_call_operand.vmem [shape: f32[1,128], index: 5, kind: input, shape index: {}]
  %s6 = inlined_call_operand.hbm [shape: f32[2,8,32], index: 6, kind: output, shape index: {}]
  %s7 = sld [smem:[#allocation0]]
  $region77: #{tpu_custom_call.1} parent=0
    _
  %s9 = ssub.s32 1, %s7
  %s10 = scalar_select 0, %s9, %s7
  $region1: #{tpu_custom_call.1} parent=0
    #allocation2 [shape = 'u8[8192]{0}', space=vmem, size = 0x2000, scoped, tag = 'input window, operand 0']
    #allocation3 [shape = 's32[2]{0}', space=sflag, size = 0x8, scoped, tag = 'scoped memory for tpu_custom_call.1']
    #allocation4 [shape = 's32[2]{0}', space=sflag, size = 0x8, scoped, tag = 'scoped memory for tpu_custom_call.1']
    #allocation5 [shape = 'u8[8192]{0}', space=vmem, size = 0x2000, scoped, tag = 'input window, operand 1']
    #allocation6 [shape = 's32[2]{0}', space=sflag, size = 0x8, scoped, tag = 'scoped memory for tpu_custom_call.1']
    #allocation7 [shape = 'u8[8192]{0}', space=vmem, size = 0x2000, scoped, tag = 'input window, operand 2']
    #allocation8 [shape = 'u8[16384]{0}', space=vmem, size = 0x4000, scoped, tag = 'input window, operand 3, single buffered']
    #allocation9 [shape = 's32[1]{0}', space=sflag, size = 0x4, scoped, tag = 'scoped memory for tpu_custom_call.1']
    #allocation10 [shape = 'u8[16384]{0}', space=vmem, size = 0x4000, scoped, tag = 'input window, operand 4, single buffered']
    #allocation11 [shape = 'u8[8192]{0}', space=vmem, size = 0x2000, scoped, tag = 'output window, operand 0']
    %11 = vsyncpa [#allocation3], 0
    %s12 = scalar_lea.sflag [#allocation3], 1
    %13 = vsyncpa %s12, 0
    %14 = vsyncpa [#allocation6], 0
    %s15 = scalar_lea.sflag [#allocation6], 1
    %16 = vsyncpa %s15, 0
    %17 = vsyncpa [#allocation9], 0
    %18 = vsyncpa [#allocation4], 0
    %s19 = scalar_lea.sflag [#allocation4], 1
    %20 = vsyncpa %s19, 0
    loop: start=0, step=1, limit=4
    $region2: #{tpu_custom_call.1} parent=1 // loop_pre_header
      _
    $region3: #{tpu_custom_call.1} parent=1 // loop_header
      %s22 = sphi 0, %s26
      %p23 = scmp.ge.s32.totalorder %s22, 4
      %s32 = sphi 0, %s34
      %s35 = sphi 0, %s32
      %s36 = sphi 0, %s35
      %s52 = sphi 0, %s36
      %s58 = sphi 0, %s60
      %s61 = sphi 0, %s58
      %s62 = sphi 0, %s61
      %s78 = sphi 0, %s62
      %s84 = sphi 0, %s86
      %s87 = sphi 0, %s84
      %s88 = sphi 0, %s87
      %s104 = sphi 0, %s88
      %s108 = sphi 0, %s108
      %s110 = sphi 0, %s108
      %s111 = sphi 0, %s110
      %s125 = sphi 0, %s111
      %s129 = sphi 0, %s129
      %s131 = sphi 0, %s129
      %s132 = sphi 0, %s131
      %s146 = sphi 0, %s132
      %s150 = sphi 0, %s150
      %s152 = sphi 0, %s150
      %s153 = sphi 0, %s152
      %s167 = sphi 0, %s153
      %s173 = sphi 0, %s175
      %s176 = sphi 0, %s173
      %s177 = sphi 0, %s176
      %s193 = sphi 0, %s177
    $region4: #{tpu_custom_call.1} parent=1 // loop_header_branch
      %25 = sbr.rel (%p23) target = $region8
    $region5: #{tpu_custom_call.1} parent=1 // loop_body
      %s27 = ssub.s32 %s22, 1
      %s28 = ssub.s32 %s22, 2
      %s29 = sadd.s32 %s22, 1
      %s30 = ssub.s32 %s22, %s29
      %p31 = scmp.eq.s32.totalorder %s30, 0
      %s33 = sadd.s32 %s32, 1
      %s34 = scalar_select %p31, %s32, %s33
      %p37 = pneg %p31
      %p38 = scmp.eq.s32.totalorder %s22, 1
      %p39 = por %p37, %p38
      %p40 = scmp.ne.s32.totalorder %s32, %s35
      %p41 = scmp.eq.s32.totalorder %s22, 0
      %p42 = por %p40, %p41
      %p43 = scmp.ne.s32.totalorder %s32, %s35
      %p44 = scmp.eq.s32.totalorder %s27, 1
      %p45 = por %p43, %p44
      %p46 = scmp.ne.s32.totalorder %s35, %s36
      %p47 = scmp.eq.s32.totalorder %s27, 0
      %p48 = por %p46, %p47
      %p49 = scmp.ne.s32.totalorder %s35, %s36
      %p50 = scmp.eq.s32.totalorder %s28, 1
      %p51 = por %p49, %p50
      %p53 = scmp.ne.s32.totalorder %s36, %s52
      %p54 = scmp.eq.s32.totalorder %s28, 0
      %p55 = por %p53, %p54
      %s56 = ssub.s32 %s22, %s29
      %p57 = scmp.eq.s32.totalorder %s56, 0
      %s59 = sadd.s32 %s58, 1
      %s60 = scalar_select %p57, %s58, %s59
      %p63 = pneg %p57
      %p64 = scmp.eq.s32.totalorder %s22, 1
      %p65 = por %p63, %p64
      %p66 = scmp.ne.s32.totalorder %s58, %s61
      %p67 = scmp.eq.s32.totalorder %s22, 0
      %p68 = por %p66, %p67
      %p69 = scmp.ne.s32.totalorder %s58, %s61
      %p70 = scmp.eq.s32.totalorder %s27, 1
      %p71 = por %p69, %p70
      %p72 = scmp.ne.s32.totalorder %s61, %s62
      %p73 = scmp.eq.s32.totalorder %s27, 0
      %p74 = por %p72, %p73
      %p75 = scmp.ne.s32.totalorder %s61, %s62
      %p76 = scmp.eq.s32.totalorder %s28, 1
      %p77 = por %p75, %p76
      %p79 = scmp.ne.s32.totalorder %s62, %s78
      %p80 = scmp.eq.s32.totalorder %s28, 0
      %p81 = por %p79, %p80
      %s82 = ssub.s32 %s22, %s29
      %p83 = scmp.eq.s32.totalorder %s82, 0
      %s85 = sadd.s32 %s84, 1
      %s86 = scalar_select %p83, %s84, %s85
      %p89 = pneg %p83
      %p90 = scmp.eq.s32.totalorder %s22, 1
      %p91 = por %p89, %p90
      %p92 = scmp.ne.s32.totalorder %s84, %s87
      %p93 = scmp.eq.s32.totalorder %s22, 0
      %p94 = por %p92, %p93
      %p95 = scmp.ne.s32.totalorder %s84, %s87
      %p96 = scmp.eq.s32.totalorder %s27, 1
      %p97 = por %p95, %p96
      %p98 = scmp.ne.s32.totalorder %s87, %s88
      %p99 = scmp.eq.s32.totalorder %s27, 0
      %p100 = por %p98, %p99
      %p101 = scmp.ne.s32.totalorder %s87, %s88
      %p102 = scmp.eq.s32.totalorder %s28, 1
      %p103 = por %p101, %p102
      %p105 = scmp.ne.s32.totalorder %s88, %s104
      %p106 = scmp.eq.s32.totalorder %s28, 0
      %p107 = por %p105, %p106
      %s109 = sadd.s32 %s108, 1
      %p112 = scmp.eq.s32.totalorder %s22, 1
      %p113 = scmp.ne.s32.totalorder %s108, %s110
      %p114 = scmp.eq.s32.totalorder %s22, 0
      %p115 = por %p113, %p114
      %p116 = scmp.ne.s32.totalorder %s108, %s110
      %p117 = scmp.eq.s32.totalorder %s27, 1
      %p118 = por %p116, %p117
      %p119 = scmp.ne.s32.totalorder %s110, %s111
      %p120 = scmp.eq.s32.totalorder %s27, 0
      %p121 = por %p119, %p120
      %p122 = scmp.ne.s32.totalorder %s110, %s111
      %p123 = scmp.eq.s32.totalorder %s28, 1
      %p124 = por %p122, %p123
      %p126 = scmp.ne.s32.totalorder %s111, %s125
      %p127 = scmp.eq.s32.totalorder %s28, 0
      %p128 = por %p126, %p127
      %s130 = sadd.s32 %s129, 1
      %p133 = scmp.eq.s32.totalorder %s22, 1
      %p134 = scmp.ne.s32.totalorder %s129, %s131
      %p135 = scmp.eq.s32.totalorder %s22, 0
      %p136 = por %p134, %p135
      %p137 = scmp.ne.s32.totalorder %s129, %s131
      %p138 = scmp.eq.s32.totalorder %s27, 1
      %p139 = por %p137, %p138
      %p140 = scmp.ne.s32.totalorder %s131, %s132
      %p141 = scmp.eq.s32.totalorder %s27, 0
      %p142 = por %p140, %p141
      %p143 = scmp.ne.s32.totalorder %s131, %s132
      %p144 = scmp.eq.s32.totalorder %s28, 1
      %p145 = por %p143, %p144
      %p147 = scmp.ne.s32.totalorder %s132, %s146
      %p148 = scmp.eq.s32.totalorder %s28, 0
      %p149 = por %p147, %p148
      %s151 = sadd.s32 %s150, 1
      %p154 = scmp.eq.s32.totalorder %s22, 1
      %p155 = scmp.ne.s32.totalorder %s150, %s152
      %p156 = scmp.eq.s32.totalorder %s22, 0
      %p157 = por %p155, %p156
      %p158 = scmp.ne.s32.totalorder %s150, %s152
      %p159 = scmp.eq.s32.totalorder %s27, 1
      %p160 = por %p158, %p159
      %p161 = scmp.ne.s32.totalorder %s152, %s153
      %p162 = scmp.eq.s32.totalorder %s27, 0
      %p163 = por %p161, %p162
      %p164 = scmp.ne.s32.totalorder %s152, %s153
      %p165 = scmp.eq.s32.totalorder %s28, 1
      %p166 = por %p164, %p165
      %p168 = scmp.ne.s32.totalorder %s153, %s167
      %p169 = scmp.eq.s32.totalorder %s28, 0
      %p170 = por %p168, %p169
      %s171 = ssub.s32 %s22, %s29
      %p172 = scmp.eq.s32.totalorder %s171, 0
      %s174 = sadd.s32 %s173, 1
      %s175 = scalar_select %p172, %s173, %s174
      %p178 = pneg %p172
      %p179 = scmp.eq.s32.totalorder %s22, 1
      %p180 = por %p178, %p179
      %p181 = scmp.ne.s32.totalorder %s173, %s176
      %p182 = scmp.eq.s32.totalorder %s22, 0
      %p183 = por %p181, %p182
      %p184 = scmp.ne.s32.totalorder %s173, %s176
      %p185 = scmp.eq.s32.totalorder %s27, 1
      %p186 = por %p184, %p185
      %p187 = scmp.ne.s32.totalorder %s176, %s177
      %p188 = scmp.eq.s32.totalorder %s27, 0
      %p189 = por %p187, %p188
      %p190 = scmp.ne.s32.totalorder %s176, %s177
      %p191 = scmp.eq.s32.totalorder %s28, 1
      %p192 = por %p190, %p191
      %p194 = scmp.ne.s32.totalorder %s177, %s193
      %p195 = scmp.eq.s32.totalorder %s28, 0
      %p196 = por %p194, %p195
      %p197 = scmp.le.s32.totalorder 1, %s22
      %p198 = scmp.lt.s32.totalorder %s22, 3
      %p199 = pnand %p197, %p198
      %p200 = pneg %p199
      // Predicated region
      $region9: #{tpu_custom_call.1} parent=5 // pred_check
        _
      $region10: #{tpu_custom_call.1} parent=5 // pred_check_branch
        %202 = sbr.rel (%p199) target = $region12
      $region11: #{tpu_custom_call.1} parent=5 // pred_region
        %s203 = ssub.s32 %s22, 1
        // Predicated region
        $region13: #{tpu_custom_call.1} parent=11 // pred_check
          %p204 = pneg %p121
        $region14: #{tpu_custom_call.1} parent=11 // pred_check_branch
          %206 = sbr.rel (%p204) target = $region16
        $region15: #{tpu_custom_call.1} parent=11 // pred_region
          %208 = vsyncadd [#allocation9], 0
          %s209 = sshll.u32 %s3, 4
          %s210 = int_to_ptr.hbm [resolvable:$true] %s209
          %s211 = sshll.u32 [#allocation8], 4
          %s212 = int_to_ptr.vmem [resolvable:$true] %s211
          %217 = dma.hbm_to_vmem [thread:$0]  %s210, 512, %s212, [#allocation9], 128, 128, 8
        $region16: #{tpu_custom_call.1} parent=11 // pred_fallthru
          _
        // Predicated region
        $region17: #{tpu_custom_call.1} parent=11 // pred_check
          %p218 = pneg %p142
        $region18: #{tpu_custom_call.1} parent=11 // pred_check_branch
          %220 = sbr.rel (%p218) target = $region20
        $region19: #{tpu_custom_call.1} parent=11 // pred_region
          %222 = vsyncadd [#allocation9], 0
          %s223 = sshll.u32 %s4, 4
          %s224 = int_to_ptr.hbm [resolvable:$true] %s223
          %s225 = sshll.u32 [#allocation10], 4
          %s226 = int_to_ptr.vmem [resolvable:$true] %s225
          %231 = dma.hbm_to_vmem [thread:$0]  %s224, 512, %s226, [#allocation9], 128, 128, 8
        $region20: #{tpu_custom_call.1} parent=11 // pred_fallthru
          _
        // Predicated region
        $region21: #{tpu_custom_call.1} parent=11 // pred_check
          %p232 = pneg %p163
        $region22: #{tpu_custom_call.1} parent=11 // pred_check_branch
          %234 = sbr.rel (%p232) target = $region24
        $region23: #{tpu_custom_call.1} parent=11 // pred_region
          _
        $region24: #{tpu_custom_call.1} parent=11 // pred_fallthru
          _
      $region12: #{tpu_custom_call.1} parent=5 // pred_fallthru
        _
      %p235 = scmp.lt.s32.totalorder %s22, 2
      // Predicated region
      $region25: #{tpu_custom_call.1} parent=5 // pred_check
        %p236 = pneg %p235
      $region26: #{tpu_custom_call.1} parent=5 // pred_check_branch
        %238 = sbr.rel (%p236) target = $region28
      $region27: #{tpu_custom_call.1} parent=5 // pred_region
        // Predicated region
        $region29: #{tpu_custom_call.1} parent=27 // pred_check
          %p239 = pneg %p42
        $region30: #{tpu_custom_call.1} parent=27 // pred_check_branch
          %241 = sbr.rel (%p239) target = $region32
        $region31: #{tpu_custom_call.1} parent=27 // pred_region
          %s242 = sand.u32 %s32, 1
          %s243 = scalar_lea.sflag [#allocation3], %s242
          %s244 = sand.u32 %s32, 1
          %s245 = smul.addr %s244, 8
          %s246 = scalar_lea.vmem [#allocation2], %s245
          %248 = vsyncadd %s243, 0
          %s249 = smul.addr %s22, 8
          %s250 = scalar_lea.hbm %s0, %s249
          %s252 = sshll.u32 %s250, 4
          %s253 = int_to_ptr.hbm [resolvable:$true] %s252
          %s254 = sshll.u32 %s246, 4
          %s255 = int_to_ptr.vmem [resolvable:$true] %s254
          %257 = dma.hbm_to_vmem [thread:$0]  %s253, 128, %s255, %s243
        $region32: #{tpu_custom_call.1} parent=27 // pred_fallthru
          _
        // Predicated region
        $region33: #{tpu_custom_call.1} parent=27 // pred_check
          %p258 = pneg %p68
        $region34: #{tpu_custom_call.1} parent=27 // pred_check_branch
          %260 = sbr.rel (%p258) target = $region36
        $region35: #{tpu_custom_call.1} parent=27 // pred_region
          %s261 = sand.u32 %s22, 1
          %s262 = scalar_lea.sflag [#allocation6], %s261
          %s263 = sand.u32 %s58, 1
          %s264 = smul.addr %s263, 8
          %s265 = scalar_lea.vmem [#allocation5], %s264
          %267 = vsyncadd %s262, 0
          %s268 = smul.addr %s22, 8
          %s269 = scalar_lea.hbm %s1, %s268
          %s271 = sshll.u32 %s269, 4
          %s272 = int_to_ptr.hbm [resolvable:$true] %s271
          %s273 = sshll.u32 %s265, 4
          %s274 = int_to_ptr.vmem [resolvable:$true] %s273
          %276 = dma.hbm_to_vmem [thread:$0]  %s272, 128, %s274, %s262
        $region36: #{tpu_custom_call.1} parent=27 // pred_fallthru
          _
        // Predicated region
        $region37: #{tpu_custom_call.1} parent=27 // pred_check
          %p277 = pneg %p94
        $region38: #{tpu_custom_call.1} parent=27 // pred_check_branch
          %279 = sbr.rel (%p277) target = $region40
        $region39: #{tpu_custom_call.1} parent=27 // pred_region
          %s280 = sand.u32 %s22, 1
          %s281 = scalar_lea.sflag [#allocation6], %s280
          %s282 = sand.u32 %s84, 1
          %s283 = smul.addr %s282, 8
          %s284 = scalar_lea.vmem [#allocation7], %s283
          %286 = vsyncadd %s281, 0
          %s287 = smul.addr %s22, 8
          %s288 = scalar_lea.hbm %s2, %s287
          %s290 = sshll.u32 %s288, 4
          %s291 = int_to_ptr.hbm [resolvable:$true] %s290
          %s292 = sshll.u32 %s284, 4
          %s293 = int_to_ptr.vmem [resolvable:$true] %s292
          %295 = dma.hbm_to_vmem [thread:$0]  %s291, 128, %s293, %s281
        $region40: #{tpu_custom_call.1} parent=27 // pred_fallthru
          _
      $region28: #{tpu_custom_call.1} parent=5 // pred_fallthru
        _
      %p296 = scmp.le.s32.totalorder 1, %s22
      %p297 = scmp.lt.s32.totalorder %s22, 3
      %p298 = pnand %p296, %p297
      %p299 = pneg %p298
      // Predicated region
      $region41: #{tpu_custom_call.1} parent=5 // pred_check
        _
      $region42: #{tpu_custom_call.1} parent=5 // pred_check_branch
        %301 = sbr.rel (%p298) target = $region44
      $region43: #{tpu_custom_call.1} parent=5 // pred_region
        %s302 = ssub.s32 %s22, 1
        %s303 = sand.u32 %s35, 1
        %s304 = scalar_lea.sflag [#allocation3], %s303
        %s305 = sand.u32 %s35, 1
        %s306 = smul.addr %s305, 8
        %s307 = scalar_lea.vmem [#allocation2], %s306
        // Predicated region
        $region45: #{tpu_custom_call.1} parent=43 // pred_check
          %p308 = pneg %p48
        $region46: #{tpu_custom_call.1} parent=43 // pred_check_branch
          %310 = sbr.rel (%p308) target = $region48
        $region47: #{tpu_custom_call.1} parent=43 // pred_region
          %312 = dma.done %s304, 128
        $region48: #{tpu_custom_call.1} parent=43 // pred_fallthru
          _
        %s313 = sand.u32 %s27, 1
        %s314 = scalar_lea.sflag [#allocation6], %s313
        %s315 = sand.u32 %s61, 1
        %s316 = smul.addr %s315, 8
        %s317 = scalar_lea.vmem [#allocation5], %s316
        // Predicated region
        $region49: #{tpu_custom_call.1} parent=43 // pred_check
          %p318 = pneg %p74
        $region50: #{tpu_custom_call.1} parent=43 // pred_check_branch
          %320 = sbr.rel (%p318) target = $region52
        $region51: #{tpu_custom_call.1} parent=43 // pred_region
          %322 = dma.done %s314, 128
        $region52: #{tpu_custom_call.1} parent=43 // pred_fallthru
          _
        %s323 = sand.u32 %s27, 1
        %s324 = scalar_lea.sflag [#allocation6], %s323
        %s325 = sand.u32 %s87, 1
        %s326 = smul.addr %s325, 8
        %s327 = scalar_lea.vmem [#allocation7], %s326
        // Predicated region
        $region53: #{tpu_custom_call.1} parent=43 // pred_check
          %p328 = pneg %p100
        $region54: #{tpu_custom_call.1} parent=43 // pred_check_branch
          %330 = sbr.rel (%p328) target = $region56
        $region55: #{tpu_custom_call.1} parent=43 // pred_region
          %332 = dma.done %s324, 128
        $region56: #{tpu_custom_call.1} parent=43 // pred_fallthru
          _
        // Predicated region
        $region57: #{tpu_custom_call.1} parent=43 // pred_check
          %p333 = pneg %p121
        $region58: #{tpu_custom_call.1} parent=43 // pred_check_branch
          %335 = sbr.rel (%p333) target = $region60
        $region59: #{tpu_custom_call.1} parent=43 // pred_region
          %337 = dma.done [#allocation9], 512
        $region60: #{tpu_custom_call.1} parent=43 // pred_fallthru
          _
        // Predicated region
        $region61: #{tpu_custom_call.1} parent=43 // pred_check
          %p338 = pneg %p142
        $region62: #{tpu_custom_call.1} parent=43 // pred_check_branch
          %340 = sbr.rel (%p338) target = $region64
        $region63: #{tpu_custom_call.1} parent=43 // pred_region
          %342 = dma.done [#allocation9], 512
        $region64: #{tpu_custom_call.1} parent=43 // pred_fallthru
          _
        %s343 = sand.u32 %s35, 1
        %s344 = scalar_lea.sflag [#allocation3], %s343
        %s345 = sand.u32 %s35, 1
        %s346 = smul.addr %s345, 8
        %s347 = scalar_lea.vmem [#allocation2], %s346
        %p348 = pneg %p48
        %p349 = pneg %p45
        %s350 = sand.u32 %s27, 1
        %s351 = scalar_lea.sflag [#allocation6], %s350
        %s352 = sand.u32 %s61, 1
        %s353 = smul.addr %s352, 8
        %s354 = scalar_lea.vmem [#allocation5], %s353
        %p355 = pneg %p74
        %p356 = pneg %p71
        %s357 = sand.u32 %s27, 1
        %s358 = scalar_lea.sflag [#allocation6], %s357
        %s359 = sand.u32 %s87, 1
        %s360 = smul.addr %s359, 8
        %s361 = scalar_lea.vmem [#allocation7], %s360
        %p362 = pneg %p100
        %p363 = pneg %p97
        %p364 = pneg %p121
        %p365 = pneg %p118
        %p366 = pneg %p142
        %p367 = pneg %p139
        %p368 = pneg %p163
        %p369 = pneg %p160
        %p370 = pneg %p189
        %p371 = pneg %p186
        %s372 = sand.u32 %s176, 1
        %s373 = scalar_lea.sflag [#allocation4], %s372
        %s374 = sand.u32 %s176, 1
        %s375 = smul.addr %s374, 8
        %s376 = scalar_lea.vmem [#allocation11], %s375
        %v377 = vld [vmem:[#allocation8] sm:$0xff]
        %v378 = vld [vmem:[#allocation8 + $0x8] sm:$0xff]
        %v379 = vld [vmem:[#allocation8 + $0x10] sm:$0xff]
        %v380 = vld [vmem:[#allocation8 + $0x18] sm:$0xff]
        %v381 = vld [vmem:[#allocation10] sm:$0xff]
        %v382 = vld [vmem:[#allocation10 + $0x8] sm:$0xff]
        %v383 = vld [vmem:[#allocation10 + $0x10] sm:$0xff]
        %v384 = vld [vmem:[#allocation10 + $0x18] sm:$0xff]
        %v385 = vld [vmem:[%s5] sm:$0x1]
        %v386 = vld [vmem:[%s307] sm:$0xff]
        %vm387 = vcmask 261120
        %v389 = vsel %vm387, %v386, 0
        %391 = vmatpush.msra.mxu0 0.0
        %392 = vmatpush.msra.mxu0 0.0
        %393 = vmatpush.msra.mxu0 0.0
        %394 = vmatpush.msra.mxu0 0.0
        %395 = vmatpush.msra.mxu0 0.0
        %396 = vmatpush.msra.mxu0 0.0
        %397 = vmatpush.msra.mxu0 0.0
        %398 = vmatpush.msra.mxu0 0.0
        %399 = vmatpush.msra.mxu0 0.0
        %400 = vmatpush.msra.mxu0 0.0
        %401 = vmatpush.msra.mxu0 0.0
        %402 = vmatpush.msra.mxu0 0.0
        %403 = vmatpush.msra.mxu0 %v380
        %404 = vmatpush.msra.mxu0 %v379
        %405 = vmatpush.msra.mxu0 %v378
        %406 = vmatpush.msra.mxu0 %v377
        %407 = vmatmul.f32.gmra.mxu0 %v389
        %v408 = vpop.f32.mrf.mxu0
        %v409 = vadd.f32 0.0, %v408
        %410 = vdwg.mxu0
        %v411 = vld [vmem:[%s327] sm:$0xff]
        %v412 = vld [vmem:[%s317] sm:$0xff]
        %v414 = vsel %vm387, %v411, 0
        %416 = vmatpush.msra.mxu0 0.0
        %417 = vmatpush.msra.mxu0 0.0
        %418 = vmatpush.msra.mxu0 0.0
        %419 = vmatpush.msra.mxu0 0.0
        %420 = vmatpush.msra.mxu0 0.0
        %421 = vmatpush.msra.mxu0 0.0
        %422 = vmatpush.msra.mxu0 0.0
        %423 = vmatpush.msra.mxu0 0.0
        %424 = vmatpush.msra.mxu0 0.0
        %425 = vmatpush.msra.mxu0 0.0
        %426 = vmatpush.msra.mxu0 0.0
        %427 = vmatpush.msra.mxu0 0.0
        %428 = vmatpush.msra.mxu0 %v384
        %429 = vmatpush.msra.mxu0 %v383
        %430 = vmatpush.msra.mxu0 %v382
        %431 = vmatpush.msra.mxu0 %v381
        %432 = vmatmul.f32.gmra.mxu0 %v414
        %v433 = vpop.f32.mrf.mxu0
        %v434 = vadd.f32 0.0, %v433
        %435 = vdwg.mxu0
        %v437 = vrot.slane %v434, 1
        %v438 = vrot.slane %v434, 2
        %v439 = vrot.slane %v434, 3
        %v440 = vrot.slane %v434, 4
        %v441 = vrot.slane %v434, 5
        %v442 = vrot.slane %v434, 6
        %v443 = vrot.slane %v434, 7
        %v444 = vperm.slane %v434, 0
        %v445 = vperm.slane %v437, 0
        %v446 = vperm.slane %v438, 0
        %v447 = vperm.slane %v439, 0
        %v448 = vperm.slane %v440, 0
        %v449 = vperm.slane %v441, 0
        %v450 = vperm.slane %v442, 0
        %v451 = vperm.slane %v443, 0
        %v460 = vadd.f32 %v409, %v444
        %v461 = vadd.f32 %v409, %v445
        %v462 = vadd.f32 %v409, %v446
        %v463 = vadd.f32 %v409, %v447
        %v464 = vadd.f32 %v409, %v448
        %v465 = vadd.f32 %v409, %v449
        %v466 = vadd.f32 %v409, %v450
        %v467 = vadd.f32 %v409, %v451
        %v468 = vtanh.pop %v460
        %v469 = vtanh.pop %v461
        %v470 = vtanh.pop %v462
        %v471 = vtanh.pop %v463
        %v472 = vtanh.pop %v464
        %v473 = vtanh.pop %v465
        %v474 = vtanh.pop %v466
        %v475 = vtanh.pop %v467
        %v477 = vperm.slane %v385, 0
        %v479 = vmul.f32 %v468, %v477
        %v480 = vmul.f32 %v469, %v477
        %v481 = vmul.f32 %v470, %v477
        %v482 = vmul.f32 %v471, %v477
        %v483 = vmul.f32 %v472, %v477
        %v484 = vmul.f32 %v473, %v477
        %v485 = vmul.f32 %v474, %v477
        %v486 = vmul.f32 %v475, %v477
        %487 = vadd.xlane.f32.xlu0 %v479
        %v488 = vpop.xlane.xlu0 %487
        %489 = vadd.xlane.f32.xlu0 %v480
        %v490 = vpop.xlane.xlu0 %489
        %491 = vadd.xlane.f32.xlu0 %v481
        %v492 = vpop.xlane.xlu0 %491
        %493 = vadd.xlane.f32.xlu0 %v482
        %v494 = vpop.xlane.xlu0 %493
        %495 = vadd.xlane.f32.xlu0 %v483
        %v496 = vpop.xlane.xlu0 %495
        %497 = vadd.xlane.f32.xlu0 %v484
        %v498 = vpop.xlane.xlu0 %497
        %499 = vadd.xlane.f32.xlu0 %v485
        %v500 = vpop.xlane.xlu0 %499
        %501 = vadd.xlane.f32.xlu0 %v486
        %v502 = vpop.xlane.xlu0 %501
        %v511 = vlaneseq
        %v512 = vand.u32 %v511, 127
        %v513 = vperm.slane %v488, %v512
        %v514 = vperm.slane %v490, %v512
        %v515 = vperm.slane %v492, %v512
        %v516 = vperm.slane %v494, %v512
        %v517 = vperm.slane %v496, %v512
        %v518 = vperm.slane %v498, %v512
        %v519 = vperm.slane %v500, %v512
        %v520 = vperm.slane %v502, %v512
        %vm521 = vcmask 1041409
        %v522 = vsel %vm521, %v514, %v513
        %vm523 = vcmask 1042434
        %v524 = vsel %vm523, %v515, %v522
        %vm525 = vcmask 1043459
        %v526 = vsel %vm525, %v516, %v524
        %vm527 = vcmask 1044484
        %v528 = vsel %vm527, %v517, %v526
        %vm529 = vcmask 1045509
        %v530 = vsel %vm529, %v518, %v528
        %vm531 = vcmask 1046534
        %v532 = vsel %vm531, %v519, %v530
        %vm533 = vcmask 1047559
        %v534 = vsel %vm533, %v520, %v532
        %vm536 = vcmask 64512
        %v537 = vsel %vm536, %v534, -inf
        %538 = vmax.xlane.f32.xlu0 %v537
        %v539 = vpop.xlane.xlu0 %538
        %v541 = vperm.slane %v539, 0
        %v542 = vperm.slane %v539, 1
        %v543 = vperm.slane %v539, 2
        %v544 = vperm.slane %v539, 3
        %v545 = vperm.slane %v539, 4
        %v546 = vperm.slane %v539, 5
        %v547 = vperm.slane %v539, 6
        %v548 = vperm.slane %v539, 7
        %v557 = vsub.f32 %v488, %v541
        %v558 = vsub.f32 %v490, %v542
        %v559 = vsub.f32 %v492, %v543
        %v560 = vsub.f32 %v494, %v544
        %v561 = vsub.f32 %v496, %v545
        %v562 = vsub.f32 %v498, %v546
        %v563 = vsub.f32 %v500, %v547
        %v564 = vsub.f32 %v502, %v548
        %v565 = vmul.f32 %v557, 1.442695
        %v566 = vpow.pop %v565
        %v567 = vmul.f32 %v558, 1.442695
        %v568 = vpow.pop %v567
        %v569 = vmul.f32 %v559, 1.442695
        %v570 = vpow.pop %v569
        %v571 = vmul.f32 %v560, 1.442695
        %v572 = vpow.pop %v571
        %v573 = vmul.f32 %v561, 1.442695
        %v574 = vpow.pop %v573
        %v575 = vmul.f32 %v562, 1.442695
        %v576 = vpow.pop %v575
        %v577 = vmul.f32 %v563, 1.442695
        %v578 = vpow.pop %v577
        %v579 = vmul.f32 %v564, 1.442695
        %v580 = vpow.pop %v579
        %589 = vset.pattern.permute.xlu0 0
        %590 = vperm.xlu0 %589, %v566
        %v591 = vpop.permute.xlu0 %590
        %592 = vset.pattern.permute.xlu0 0
        %593 = vperm.xlu0 %592, %v568
        %v594 = vpop.permute.xlu0 %593
        %595 = vset.pattern.permute.xlu0 0
        %596 = vperm.xlu0 %595, %v570
        %v597 = vpop.permute.xlu0 %596
        %598 = vset.pattern.permute.xlu0 0
        %599 = vperm.xlu0 %598, %v572
        %v600 = vpop.permute.xlu0 %599
        %601 = vset.pattern.permute.xlu0 0
        %602 = vperm.xlu0 %601, %v574
        %v603 = vpop.permute.xlu0 %602
        %604 = vset.pattern.permute.xlu0 0
        %605 = vperm.xlu0 %604, %v576
        %v606 = vpop.permute.xlu0 %605
        %607 = vset.pattern.permute.xlu0 0
        %608 = vperm.xlu0 %607, %v578
        %v609 = vpop.permute.xlu0 %608
        %610 = vset.pattern.permute.xlu0 0
        %611 = vperm.xlu0 %610, %v580
        %v612 = vpop.permute.xlu0 %611
        %v613 = vperm.slane %v591, %v512
        %v614 = vperm.slane %v594, %v512
        %v615 = vperm.slane %v597, %v512
        %v616 = vperm.slane %v600, %v512
        %v617 = vperm.slane %v603, %v512
        %v618 = vperm.slane %v606, %v512
        %v619 = vperm.slane %v609, %v512
        %v620 = vperm.slane %v612, %v512
        %v621 = vsel %vm521, %v614, %v613
        %v622 = vsel %vm523, %v615, %v621
        %v623 = vsel %vm525, %v616, %v622
        %v624 = vsel %vm527, %v617, %v623
        %v625 = vsel %vm529, %v618, %v624
        %v626 = vsel %vm531, %v619, %v625
        %v627 = vsel %vm533, %v620, %v626
        %v629 = vsel %vm536, %v627, 0.0
        %630 = vadd.xlane.f32.xlu0 %v629
        %v631 = vpop.xlane.xlu0 %630
        %v633 = vperm.slane %v631, 0
        %v634 = vperm.slane %v631, 1
        %v635 = vperm.slane %v631, 2
        %v636 = vperm.slane %v631, 3
        %v637 = vperm.slane %v631, 4
        %v638 = vperm.slane %v631, 5
        %v639 = vperm.slane %v631, 6
        %v640 = vperm.slane %v631, 7
        %v649 = vrcp.pop %v633
        %v650 = vmul.f32 %v633, %v649
        %v651 = vsub.f32 1.0, %v650
        %v652 = vmul.f32 %v649, %v651
        %v653 = vadd.f32 %v649, %v652
        %vm654 = vweird.f32 %v633
        %vm655 = vweird.f32 %v649
        %vm656 = vmor %vm654, %vm655
        %v657 = vsel %vm656, %v649, %v653
        %v658 = vand.u32 2147483647, %v633
        %vm659 = vcmp.eq.f32.partialorder %v658, 8.507059e+37
        %v660 = vand.u32 %v633, 2147483648
        %v661 = vor.u32 1.1754944e-38, %v660
        %v662 = vsel %vm659, %v661, %v657
        %v663 = vmul.f32 %v566, %v662
        %v664 = vrcp.pop %v634
        %v665 = vmul.f32 %v634, %v664
        %v666 = vsub.f32 1.0, %v665
        %v667 = vmul.f32 %v664, %v666
        %v668 = vadd.f32 %v664, %v667
        %vm669 = vweird.f32 %v634
        %vm670 = vweird.f32 %v664
        %vm671 = vmor %vm669, %vm670
        %v672 = vsel %vm671, %v664, %v668
        %v673 = vand.u32 2147483647, %v634
        %vm674 = vcmp.eq.f32.partialorder %v673, 8.507059e+37
        %v675 = vand.u32 %v634, 2147483648
        %v676 = vor.u32 1.1754944e-38, %v675
        %v677 = vsel %vm674, %v676, %v672
        %v678 = vmul.f32 %v568, %v677
        %v679 = vrcp.pop %v635
        %v680 = vmul.f32 %v635, %v679
        %v681 = vsub.f32 1.0, %v680
        %v682 = vmul.f32 %v679, %v681
        %v683 = vadd.f32 %v679, %v682
        %vm684 = vweird.f32 %v635
        %vm685 = vweird.f32 %v679
        %vm686 = vmor %vm684, %vm685
        %v687 = vsel %vm686, %v679, %v683
        %v688 = vand.u32 2147483647, %v635
        %vm689 = vcmp.eq.f32.partialorder %v688, 8.507059e+37
        %v690 = vand.u32 %v635, 2147483648
        %v691 = vor.u32 1.1754944e-38, %v690
        %v692 = vsel %vm689, %v691, %v687
        %v693 = vmul.f32 %v570, %v692
        %v694 = vrcp.pop %v636
        %v695 = vmul.f32 %v636, %v694
        %v696 = vsub.f32 1.0, %v695
        %v697 = vmul.f32 %v694, %v696
        %v698 = vadd.f32 %v694, %v697
        %vm699 = vweird.f32 %v636
        %vm700 = vweird.f32 %v694
        %vm701 = vmor %vm699, %vm700
        %v702 = vsel %vm701, %v694, %v698
        %v703 = vand.u32 2147483647, %v636
        %vm704 = vcmp.eq.f32.partialorder %v703, 8.507059e+37
        %v705 = vand.u32 %v636, 2147483648
        %v706 = vor.u32 1.1754944e-38, %v705
        %v707 = vsel %vm704, %v706, %v702
        %v708 = vmul.f32 %v572, %v707
        %v709 = vrcp.pop %v637
        %v710 = vmul.f32 %v637, %v709
        %v711 = vsub.f32 1.0, %v710
        %v712 = vmul.f32 %v709, %v711
        %v713 = vadd.f32 %v709, %v712
        %vm714 = vweird.f32 %v637
        %vm715 = vweird.f32 %v709
        %vm716 = vmor %vm714, %vm715
        %v717 = vsel %vm716, %v709, %v713
        %v718 = vand.u32 2147483647, %v637
        %vm719 = vcmp.eq.f32.partialorder %v718, 8.507059e+37
        %v720 = vand.u32 %v637, 2147483648
        %v721 = vor.u32 1.1754944e-38, %v720
        %v722 = vsel %vm719, %v721, %v717
        %v723 = vmul.f32 %v574, %v722
        %v724 = vrcp.pop %v638
        %v725 = vmul.f32 %v638, %v724
        %v726 = vsub.f32 1.0, %v725
        %v727 = vmul.f32 %v724, %v726
        %v728 = vadd.f32 %v724, %v727
        %vm729 = vweird.f32 %v638
        %vm730 = vweird.f32 %v724
        %vm731 = vmor %vm729, %vm730
        %v732 = vsel %vm731, %v724, %v728
        %v733 = vand.u32 2147483647, %v638
        %vm734 = vcmp.eq.f32.partialorder %v733, 8.507059e+37
        %v735 = vand.u32 %v638, 2147483648
        %v736 = vor.u32 1.1754944e-38, %v735
        %v737 = vsel %vm734, %v736, %v732
        %v738 = vmul.f32 %v576, %v737
        %v739 = vrcp.pop %v639
        %v740 = vmul.f32 %v639, %v739
        %v741 = vsub.f32 1.0, %v740
        %v742 = vmul.f32 %v739, %v741
        %v743 = vadd.f32 %v739, %v742
        %vm744 = vweird.f32 %v639
        %vm745 = vweird.f32 %v739
        %vm746 = vmor %vm744, %vm745
        %v747 = vsel %vm746, %v739, %v743
        %v748 = vand.u32 2147483647, %v639
        %vm749 = vcmp.eq.f32.partialorder %v748, 8.507059e+37
        %v750 = vand.u32 %v639, 2147483648
        %v751 = vor.u32 1.1754944e-38, %v750
        %v752 = vsel %vm749, %v751, %v747
        %v753 = vmul.f32 %v578, %v752
        %v754 = vrcp.pop %v640
        %v755 = vmul.f32 %v640, %v754
        %v756 = vsub.f32 1.0, %v755
        %v757 = vmul.f32 %v754, %v756
        %v758 = vadd.f32 %v754, %v757
        %vm759 = vweird.f32 %v640
        %vm760 = vweird.f32 %v754
        %vm761 = vmor %vm759, %vm760
        %v762 = vsel %vm761, %v754, %v758
        %v763 = vand.u32 2147483647, %v640
        %vm764 = vcmp.eq.f32.partialorder %v763, 8.507059e+37
        %v765 = vand.u32 %v640, 2147483648
        %v766 = vor.u32 1.1754944e-38, %v765
        %v767 = vsel %vm764, %v766, %v762
        %v768 = vmul.f32 %v580, %v767
        %777 = vset.pattern.permute.xlu0 0
        %778 = vperm.xlu0 %777, %v663
        %v779 = vpop.permute.xlu0 %778
        %780 = vset.pattern.permute.xlu0 0
        %781 = vperm.xlu0 %780, %v678
        %v782 = vpop.permute.xlu0 %781
        %783 = vset.pattern.permute.xlu0 0
        %784 = vperm.xlu0 %783, %v693
        %v785 = vpop.permute.xlu0 %784
        %786 = vset.pattern.permute.xlu0 0
        %787 = vperm.xlu0 %786, %v708
        %v788 = vpop.permute.xlu0 %787
        %789 = vset.pattern.permute.xlu0 0
        %790 = vperm.xlu0 %789, %v723
        %v791 = vpop.permute.xlu0 %790
        %792 = vset.pattern.permute.xlu0 0
        %793 = vperm.xlu0 %792, %v738
        %v794 = vpop.permute.xlu0 %793
        %795 = vset.pattern.permute.xlu0 0
        %796 = vperm.xlu0 %795, %v753
        %v797 = vpop.permute.xlu0 %796
        %798 = vset.pattern.permute.xlu0 0
        %799 = vperm.xlu0 %798, %v768
        %v800 = vpop.permute.xlu0 %799
        %v801 = vperm.slane %v779, %v512
        %v802 = vperm.slane %v782, %v512
        %v803 = vperm.slane %v785, %v512
        %v804 = vperm.slane %v788, %v512
        %v805 = vperm.slane %v791, %v512
        %v806 = vperm.slane %v794, %v512
        %v807 = vperm.slane %v797, %v512
        %v808 = vperm.slane %v800, %v512
        %v809 = vsel %vm521, %v802, %v801
        %v810 = vsel %vm523, %v803, %v809
        %v811 = vsel %vm525, %v804, %v810
        %v812 = vsel %vm527, %v805, %v811
        %v813 = vsel %vm529, %v806, %v812
        %v814 = vsel %vm531, %v807, %v813
        %v815 = vsel %vm533, %v808, %v814
        %v816 = vsel %vm536, %v815, 0
        %818 = vmatpush.msra.mxu0 0.0
        %819 = vmatpush.msra.mxu0 0.0
        %820 = vmatpush.msra.mxu0 0.0
        %821 = vmatpush.msra.mxu0 0.0
        %822 = vmatpush.msra.mxu0 0.0
        %823 = vmatpush.msra.mxu0 0.0
        %824 = vmatpush.msra.mxu0 0.0
        %825 = vmatpush.msra.mxu0 0.0
        %826 = vmatpush.msra.mxu0 0.0
        %827 = vmatpush.msra.mxu0 0.0
        %828 = vmatpush.msra.mxu0 0.0
        %829 = vmatpush.msra.mxu0 0.0
        %830 = vmatpush.msra.mxu0 0.0
        %831 = vmatpush.msra.mxu0 0.0
        %832 = vmatpush.msra.mxu0 0.0
        %833 = vmatpush.msra.mxu0 %v386
        %834 = vmatmul.f32.gmra.mxu0 %v816
        %v835 = vpop.f32.mrf.mxu0
        %v836 = vadd.f32 0.0, %v835
        %837 = vdwg.mxu0
        %v838 = vperm.slane %v663, 7
        %v839 = vperm.slane %v678, 7
        %v840 = vperm.slane %v693, 7
        %v841 = vperm.slane %v708, 7
        %v842 = vperm.slane %v723, 7
        %v843 = vperm.slane %v738, 7
        %v844 = vperm.slane %v753, 7
        %v845 = vperm.slane %v768, 7
        %v847 = vperm.slane %v412, 0
        %v848 = vlaneseq
        %v849 = vshrl.u32 %v848, 7
        %851 = vset.pattern.permute.xlu0 %v849
        %852 = vperm.xlu0 %851, %v847
        %v853 = vpop.permute.xlu0 %852
        %v854 = vlaneseq
        %v855 = vshrl.u32 %v854, 7
        %v856 = vadd.s32 %v855, 8
        %857 = vset.pattern.permute.xlu0 %v856
        %858 = vperm.xlu0 %857, %v847
        %v859 = vpop.permute.xlu0 %858
        %v860 = vlaneseq
        %v861 = vshrl.u32 %v860, 7
        %v862 = vadd.s32 %v861, 16
        %863 = vset.pattern.permute.xlu0 %v862
        %864 = vperm.xlu0 %863, %v847
        %v865 = vpop.permute.xlu0 %864
        %v866 = vlaneseq
        %v867 = vshrl.u32 %v866, 7
        %v868 = vadd.s32 %v867, 24
        %869 = vset.pattern.permute.xlu0 %v868
        %870 = vperm.xlu0 %869, %v847
        %v871 = vpop.permute.xlu0 %870
        %v872 = vperm.slane %v412, 1
        %v873 = vlaneseq
        %v874 = vshrl.u32 %v873, 7
        %876 = vset.pattern.permute.xlu0 %v874
        %877 = vperm.xlu0 %876, %v872
        %v878 = vpop.permute.xlu0 %877
        %v879 = vlaneseq
        %v880 = vshrl.u32 %v879, 7
        %v881 = vadd.s32 %v880, 8
        %882 = vset.pattern.permute.xlu0 %v881
        %883 = vperm.xlu0 %882, %v872
        %v884 = vpop.permute.xlu0 %883
        %v885 = vlaneseq
        %v886 = vshrl.u32 %v885, 7
        %v887 = vadd.s32 %v886, 16
        %888 = vset.pattern.permute.xlu0 %v887
        %889 = vperm.xlu0 %888, %v872
        %v890 = vpop.permute.xlu0 %889
        %v891 = vlaneseq
        %v892 = vshrl.u32 %v891, 7
        %v893 = vadd.s32 %v892, 24
        %894 = vset.pattern.permute.xlu0 %v893
        %895 = vperm.xlu0 %894, %v872
        %v896 = vpop.permute.xlu0 %895
        %v897 = vperm.slane %v412, 2
        %v898 = vlaneseq
        %v899 = vshrl.u32 %v898, 7
        %901 = vset.pattern.permute.xlu0 %v899
        %902 = vperm.xlu0 %901, %v897
        %v903 = vpop.permute.xlu0 %902
        %v904 = vlaneseq
        %v905 = vshrl.u32 %v904, 7
        %v906 = vadd.s32 %v905, 8
        %907 = vset.pattern.permute.xlu0 %v906
        %908 = vperm.xlu0 %907, %v897
        %v909 = vpop.permute.xlu0 %908
        %v910 = vlaneseq
        %v911 = vshrl.u32 %v910, 7
        %v912 = vadd.s32 %v911, 16
        %913 = vset.pattern.permute.xlu0 %v912
        %914 = vperm.xlu0 %913, %v897
        %v915 = vpop.permute.xlu0 %914
        %v916 = vlaneseq
        %v917 = vshrl.u32 %v916, 7
        %v918 = vadd.s32 %v917, 24
        %919 = vset.pattern.permute.xlu0 %v918
        %920 = vperm.xlu0 %919, %v897
        %v921 = vpop.permute.xlu0 %920
        %v922 = vperm.slane %v412, 3
        %v923 = vlaneseq
        %v924 = vshrl.u32 %v923, 7
        %926 = vset.pattern.permute.xlu0 %v924
        %927 = vperm.xlu0 %926, %v922
        %v928 = vpop.permute.xlu0 %927
        %v929 = vlaneseq
        %v930 = vshrl.u32 %v929, 7
        %v931 = vadd.s32 %v930, 8
        %932 = vset.pattern.permute.xlu0 %v931
        %933 = vperm.xlu0 %932, %v922
        %v934 = vpop.permute.xlu0 %933
        %v935 = vlaneseq
        %v936 = vshrl.u32 %v935, 7
        %v937 = vadd.s32 %v936, 16
        %938 = vset.pattern.permute.xlu0 %v937
        %939 = vperm.xlu0 %938, %v922
        %v940 = vpop.permute.xlu0 %939
        %v941 = vlaneseq
        %v942 = vshrl.u32 %v941, 7
        %v943 = vadd.s32 %v942, 24
        %944 = vset.pattern.permute.xlu0 %v943
        %945 = vperm.xlu0 %944, %v922
        %v946 = vpop.permute.xlu0 %945
        %v947 = vperm.slane %v412, 4
        %v948 = vlaneseq
        %v949 = vshrl.u32 %v948, 7
        %951 = vset.pattern.permute.xlu0 %v949
        %952 = vperm.xlu0 %951, %v947
        %v953 = vpop.permute.xlu0 %952
        %v954 = vlaneseq
        %v955 = vshrl.u32 %v954, 7
        %v956 = vadd.s32 %v955, 8
        %957 = vset.pattern.permute.xlu0 %v956
        %958 = vperm.xlu0 %957, %v947
        %v959 = vpop.permute.xlu0 %958
        %v960 = vlaneseq
        %v961 = vshrl.u32 %v960, 7
        %v962 = vadd.s32 %v961, 16
        %963 = vset.pattern.permute.xlu0 %v962
        %964 = vperm.xlu0 %963, %v947
        %v965 = vpop.permute.xlu0 %964
        %v966 = vlaneseq
        %v967 = vshrl.u32 %v966, 7
        %v968 = vadd.s32 %v967, 24
        %969 = vset.pattern.permute.xlu0 %v968
        %970 = vperm.xlu0 %969, %v947
        %v971 = vpop.permute.xlu0 %970
        %v972 = vperm.slane %v412, 5
        %v973 = vlaneseq
        %v974 = vshrl.u32 %v973, 7
        %976 = vset.pattern.permute.xlu0 %v974
        %977 = vperm.xlu0 %976, %v972
        %v978 = vpop.permute.xlu0 %977
        %v979 = vlaneseq
        %v980 = vshrl.u32 %v979, 7
        %v981 = vadd.s32 %v980, 8
        %982 = vset.pattern.permute.xlu0 %v981
        %983 = vperm.xlu0 %982, %v972
        %v984 = vpop.permute.xlu0 %983
        %v985 = vlaneseq
        %v986 = vshrl.u32 %v985, 7
        %v987 = vadd.s32 %v986, 16
        %988 = vset.pattern.permute.xlu0 %v987
        %989 = vperm.xlu0 %988, %v972
        %v990 = vpop.permute.xlu0 %989
        %v991 = vlaneseq
        %v992 = vshrl.u32 %v991, 7
        %v993 = vadd.s32 %v992, 24
        %994 = vset.pattern.permute.xlu0 %v993
        %995 = vperm.xlu0 %994, %v972
        %v996 = vpop.permute.xlu0 %995
        %v997 = vperm.slane %v412, 6
        %v998 = vlaneseq
        %v999 = vshrl.u32 %v998, 7
        %1001 = vset.pattern.permute.xlu0 %v999
        %1002 = vperm.xlu0 %1001, %v997
        %v1003 = vpop.permute.xlu0 %1002
        %v1004 = vlaneseq
        %v1005 = vshrl.u32 %v1004, 7
        %v1006 = vadd.s32 %v1005, 8
        %1007 = vset.pattern.permute.xlu0 %v1006
        %1008 = vperm.xlu0 %1007, %v997
        %v1009 = vpop.permute.xlu0 %1008
        %v1010 = vlaneseq
        %v1011 = vshrl.u32 %v1010, 7
        %v1012 = vadd.s32 %v1011, 16
        %1013 = vset.pattern.permute.xlu0 %v1012
        %1014 = vperm.xlu0 %1013, %v997
        %v1015 = vpop.permute.xlu0 %1014
        %v1016 = vlaneseq
        %v1017 = vshrl.u32 %v1016, 7
        %v1018 = vadd.s32 %v1017, 24
        %1019 = vset.pattern.permute.xlu0 %v1018
        %1020 = vperm.xlu0 %1019, %v997
        %v1021 = vpop.permute.xlu0 %1020
        %v1022 = vperm.slane %v412, 7
        %v1023 = vlaneseq
        %v1024 = vshrl.u32 %v1023, 7
        %1026 = vset.pattern.permute.xlu0 %v1024
        %1027 = vperm.xlu0 %1026, %v1022
        %v1028 = vpop.permute.xlu0 %1027
        %v1029 = vlaneseq
        %v1030 = vshrl.u32 %v1029, 7
        %v1031 = vadd.s32 %v1030, 8
        %1032 = vset.pattern.permute.xlu0 %v1031
        %1033 = vperm.xlu0 %1032, %v1022
        %v1034 = vpop.permute.xlu0 %1033
        %v1035 = vlaneseq
        %v1036 = vshrl.u32 %v1035, 7
        %v1037 = vadd.s32 %v1036, 16
        %1038 = vset.pattern.permute.xlu0 %v1037
        %1039 = vperm.xlu0 %1038, %v1022
        %v1040 = vpop.permute.xlu0 %1039
        %v1041 = vlaneseq
        %v1042 = vshrl.u32 %v1041, 7
        %v1043 = vadd.s32 %v1042, 24
        %1044 = vset.pattern.permute.xlu0 %v1043
        %1045 = vperm.xlu0 %1044, %v1022
        %v1046 = vpop.permute.xlu0 %1045
        %v1079 = vmul.f32 %v838, %v853
        %v1080 = vmul.f32 %v838, %v859
        %v1081 = vmul.f32 %v838, %v865
        %v1082 = vmul.f32 %v838, %v871
        %v1083 = vmul.f32 %v839, %v878
        %v1084 = vmul.f32 %v839, %v884
        %v1085 = vmul.f32 %v839, %v890
        %v1086 = vmul.f32 %v839, %v896
        %v1087 = vmul.f32 %v840, %v903
        %v1088 = vmul.f32 %v840, %v909
        %v1089 = vmul.f32 %v840, %v915
        %v1090 = vmul.f32 %v840, %v921
        %v1091 = vmul.f32 %v841, %v928
        %v1092 = vmul.f32 %v841, %v934
        %v1093 = vmul.f32 %v841, %v940
        %v1094 = vmul.f32 %v841, %v946
        %v1095 = vmul.f32 %v842, %v953
        %v1096 = vmul.f32 %v842, %v959
        %v1097 = vmul.f32 %v842, %v965
        %v1098 = vmul.f32 %v842, %v971
        %v1099 = vmul.f32 %v843, %v978
        %v1100 = vmul.f32 %v843, %v984
        %v1101 = vmul.f32 %v843, %v990
        %v1102 = vmul.f32 %v843, %v996
        %v1103 = vmul.f32 %v844, %v1003
        %v1104 = vmul.f32 %v844, %v1009
        %v1105 = vmul.f32 %v844, %v1015
        %v1106 = vmul.f32 %v844, %v1021
        %v1107 = vmul.f32 %v845, %v1028
        %v1108 = vmul.f32 %v845, %v1034
        %v1109 = vmul.f32 %v845, %v1040
        %v1110 = vmul.f32 %v845, %v1046
        %v1111 = vsub.f32 1.0, %v663
        %v1112 = vsub.f32 1.0, %v678
        %v1113 = vsub.f32 1.0, %v693
        %v1114 = vsub.f32 1.0, %v708
        %v1115 = vsub.f32 1.0, %v723
        %v1116 = vsub.f32 1.0, %v738
        %v1117 = vsub.f32 1.0, %v753
        %v1118 = vsub.f32 1.0, %v768
        %v1119 = vperm.slane %v1111, 7
        %v1120 = vperm.slane %v1112, 7
        %v1121 = vperm.slane %v1113, 7
        %v1122 = vperm.slane %v1114, 7
        %v1123 = vperm.slane %v1115, 7
        %v1124 = vperm.slane %v1116, 7
        %v1125 = vperm.slane %v1117, 7
        %v1126 = vperm.slane %v1118, 7
        %v1128 = vperm.slane %v836, 0
        %v1129 = vlaneseq
        %v1130 = vshrl.u32 %v1129, 7
        %1132 = vset.pattern.permute.xlu0 %v1130
        %1133 = vperm.xlu0 %1132, %v1128
        %v1134 = vpop.permute.xlu0 %1133
        %v1135 = vlaneseq
        %v1136 = vshrl.u32 %v1135, 7
        %v1137 = vadd.s32 %v1136, 8
        %1138 = vset.pattern.permute.xlu0 %v1137
        %1139 = vperm.xlu0 %1138, %v1128
        %v1140 = vpop.permute.xlu0 %1139
        %v1141 = vlaneseq
        %v1142 = vshrl.u32 %v1141, 7
        %v1143 = vadd.s32 %v1142, 16
        %1144 = vset.pattern.permute.xlu0 %v1143
        %1145 = vperm.xlu0 %1144, %v1128
        %v1146 = vpop.permute.xlu0 %1145
        %v1147 = vlaneseq
        %v1148 = vshrl.u32 %v1147, 7
        %v1149 = vadd.s32 %v1148, 24
        %1150 = vset.pattern.permute.xlu0 %v1149
        %1151 = vperm.xlu0 %1150, %v1128
        %v1152 = vpop.permute.xlu0 %1151
        %v1153 = vperm.slane %v836, 1
        %v1154 = vlaneseq
        %v1155 = vshrl.u32 %v1154, 7
        %1157 = vset.pattern.permute.xlu0 %v1155
        %1158 = vperm.xlu0 %1157, %v1153
        %v1159 = vpop.permute.xlu0 %1158
        %v1160 = vlaneseq
        %v1161 = vshrl.u32 %v1160, 7
        %v1162 = vadd.s32 %v1161, 8
        %1163 = vset.pattern.permute.xlu0 %v1162
        %1164 = vperm.xlu0 %1163, %v1153
        %v1165 = vpop.permute.xlu0 %1164
        %v1166 = vlaneseq
        %v1167 = vshrl.u32 %v1166, 7
        %v1168 = vadd.s32 %v1167, 16
        %1169 = vset.pattern.permute.xlu0 %v1168
        %1170 = vperm.xlu0 %1169, %v1153
        %v1171 = vpop.permute.xlu0 %1170
        %v1172 = vlaneseq
        %v1173 = vshrl.u32 %v1172, 7
        %v1174 = vadd.s32 %v1173, 24
        %1175 = vset.pattern.permute.xlu0 %v1174
        %1176 = vperm.xlu0 %1175, %v1153
        %v1177 = vpop.permute.xlu0 %1176
        %v1178 = vperm.slane %v836, 2
        %v1179 = vlaneseq
        %v1180 = vshrl.u32 %v1179, 7
        %1182 = vset.pattern.permute.xlu0 %v1180
        %1183 = vperm.xlu0 %1182, %v1178
        %v1184 = vpop.permute.xlu0 %1183
        %v1185 = vlaneseq
        %v1186 = vshrl.u32 %v1185, 7
        %v1187 = vadd.s32 %v1186, 8
        %1188 = vset.pattern.permute.xlu0 %v1187
        %1189 = vperm.xlu0 %1188, %v1178
        %v1190 = vpop.permute.xlu0 %1189
        %v1191 = vlaneseq
        %v1192 = vshrl.u32 %v1191, 7
        %v1193 = vadd.s32 %v1192, 16
        %1194 = vset.pattern.permute.xlu0 %v1193
        %1195 = vperm.xlu0 %1194, %v1178
        %v1196 = vpop.permute.xlu0 %1195
        %v1197 = vlaneseq
        %v1198 = vshrl.u32 %v1197, 7
        %v1199 = vadd.s32 %v1198, 24
        %1200 = vset.pattern.permute.xlu0 %v1199
        %1201 = vperm.xlu0 %1200, %v1178
        %v1202 = vpop.permute.xlu0 %1201
        %v1203 = vperm.slane %v836, 3
        %v1204 = vlaneseq
        %v1205 = vshrl.u32 %v1204, 7
        %1207 = vset.pattern.permute.xlu0 %v1205
        %1208 = vperm.xlu0 %1207, %v1203
        %v1209 = vpop.permute.xlu0 %1208
        %v1210 = vlaneseq
        %v1211 = vshrl.u32 %v1210, 7
        %v1212 = vadd.s32 %v1211, 8
        %1213 = vset.pattern.permute.xlu0 %v1212
        %1214 = vperm.xlu0 %1213, %v1203
        %v1215 = vpop.permute.xlu0 %1214
        %v1216 = vlaneseq
        %v1217 = vshrl.u32 %v1216, 7
        %v1218 = vadd.s32 %v1217, 16
        %1219 = vset.pattern.permute.xlu0 %v1218
        %1220 = vperm.xlu0 %1219, %v1203
        %v1221 = vpop.permute.xlu0 %1220
        %v1222 = vlaneseq
        %v1223 = vshrl.u32 %v1222, 7
        %v1224 = vadd.s32 %v1223, 24
        %1225 = vset.pattern.permute.xlu0 %v1224
        %1226 = vperm.xlu0 %1225, %v1203
        %v1227 = vpop.permute.xlu0 %1226
        %v1228 = vperm.slane %v836, 4
        %v1229 = vlaneseq
        %v1230 = vshrl.u32 %v1229, 7
        %1232 = vset.pattern.permute.xlu0 %v1230
        %1233 = vperm.xlu0 %1232, %v1228
        %v1234 = vpop.permute.xlu0 %1233
        %v1235 = vlaneseq
        %v1236 = vshrl.u32 %v1235, 7
        %v1237 = vadd.s32 %v1236, 8
        %1238 = vset.pattern.permute.xlu0 %v1237
        %1239 = vperm.xlu0 %1238, %v1228
        %v1240 = vpop.permute.xlu0 %1239
        %v1241 = vlaneseq
        %v1242 = vshrl.u32 %v1241, 7
        %v1243 = vadd.s32 %v1242, 16
        %1244 = vset.pattern.permute.xlu0 %v1243
        %1245 = vperm.xlu0 %1244, %v1228
        %v1246 = vpop.permute.xlu0 %1245
        %v1247 = vlaneseq
        %v1248 = vshrl.u32 %v1247, 7
        %v1249 = vadd.s32 %v1248, 24
        %1250 = vset.pattern.permute.xlu0 %v1249
        %1251 = vperm.xlu0 %1250, %v1228
        %v1252 = vpop.permute.xlu0 %1251
        %v1253 = vperm.slane %v836, 5
        %v1254 = vlaneseq
        %v1255 = vshrl.u32 %v1254, 7
        %1257 = vset.pattern.permute.xlu0 %v1255
        %1258 = vperm.xlu0 %1257, %v1253
        %v1259 = vpop.permute.xlu0 %1258
        %v1260 = vlaneseq
        %v1261 = vshrl.u32 %v1260, 7
        %v1262 = vadd.s32 %v1261, 8
        %1263 = vset.pattern.permute.xlu0 %v1262
        %1264 = vperm.xlu0 %1263, %v1253
        %v1265 = vpop.permute.xlu0 %1264
        %v1266 = vlaneseq
        %v1267 = vshrl.u32 %v1266, 7
        %v1268 = vadd.s32 %v1267, 16
        %1269 = vset.pattern.permute.xlu0 %v1268
        %1270 = vperm.xlu0 %1269, %v1253
        %v1271 = vpop.permute.xlu0 %1270
        %v1272 = vlaneseq
        %v1273 = vshrl.u32 %v1272, 7
        %v1274 = vadd.s32 %v1273, 24
        %1275 = vset.pattern.permute.xlu0 %v1274
        %1276 = vperm.xlu0 %1275, %v1253
        %v1277 = vpop.permute.xlu0 %1276
        %v1278 = vperm.slane %v836, 6
        %v1279 = vlaneseq
        %v1280 = vshrl.u32 %v1279, 7
        %1282 = vset.pattern.permute.xlu0 %v1280
        %1283 = vperm.xlu0 %1282, %v1278
        %v1284 = vpop.permute.xlu0 %1283
        %v1285 = vlaneseq
        %v1286 = vshrl.u32 %v1285, 7
        %v1287 = vadd.s32 %v1286, 8
        %1288 = vset.pattern.permute.xlu0 %v1287
        %1289 = vperm.xlu0 %1288, %v1278
        %v1290 = vpop.permute.xlu0 %1289
        %v1291 = vlaneseq
        %v1292 = vshrl.u32 %v1291, 7
        %v1293 = vadd.s32 %v1292, 16
        %1294 = vset.pattern.permute.xlu0 %v1293
        %1295 = vperm.xlu0 %1294, %v1278
        %v1296 = vpop.permute.xlu0 %1295
        %v1297 = vlaneseq
        %v1298 = vshrl.u32 %v1297, 7
        %v1299 = vadd.s32 %v1298, 24
        %1300 = vset.pattern.permute.xlu0 %v1299
        %1301 = vperm.xlu0 %1300, %v1278
        %v1302 = vpop.permute.xlu0 %1301
        %v1303 = vperm.slane %v836, 7
        %v1304 = vlaneseq
        %v1305 = vshrl.u32 %v1304, 7
        %1307 = vset.pattern.permute.xlu0 %v1305
        %1308 = vperm.xlu0 %1307, %v1303
        %v1309 = vpop.permute.xlu0 %1308
        %v1310 = vlaneseq
        %v1311 = vshrl.u32 %v1310, 7
        %v1312 = vadd.s32 %v1311, 8
        %1313 = vset.pattern.permute.xlu0 %v1312
        %1314 = vperm.xlu0 %1313, %v1303
        %v1315 = vpop.permute.xlu0 %1314
        %v1316 = vlaneseq
        %v1317 = vshrl.u32 %v1316, 7
        %v1318 = vadd.s32 %v1317, 16
        %1319 = vset.pattern.permute.xlu0 %v1318
        %1320 = vperm.xlu0 %1319, %v1303
        %v1321 = vpop.permute.xlu0 %1320
        %v1322 = vlaneseq
        %v1323 = vshrl.u32 %v1322, 7
        %v1324 = vadd.s32 %v1323, 24
        %1325 = vset.pattern.permute.xlu0 %v1324
        %1326 = vperm.xlu0 %1325, %v1303
        %v1327 = vpop.permute.xlu0 %1326
        %v1360 = vmul.f32 %v1119, %v1134
        %v1361 = vmul.f32 %v1119, %v1140
        %v1362 = vmul.f32 %v1119, %v1146
        %v1363 = vmul.f32 %v1119, %v1152
        %v1364 = vmul.f32 %v1120, %v1159
        %v1365 = vmul.f32 %v1120, %v1165
        %v1366 = vmul.f32 %v1120, %v1171
        %v1367 = vmul.f32 %v1120, %v1177
        %v1368 = vmul.f32 %v1121, %v1184
        %v1369 = vmul.f32 %v1121, %v1190
        %v1370 = vmul.f32 %v1121, %v1196
        %v1371 = vmul.f32 %v1121, %v1202
        %v1372 = vmul.f32 %v1122, %v1209
        %v1373 = vmul.f32 %v1122, %v1215
        %v1374 = vmul.f32 %v1122, %v1221
        %v1375 = vmul.f32 %v1122, %v1227
        %v1376 = vmul.f32 %v1123, %v1234
        %v1377 = vmul.f32 %v1123, %v1240
        %v1378 = vmul.f32 %v1123, %v1246
        %v1379 = vmul.f32 %v1123, %v1252
        %v1380 = vmul.f32 %v1124, %v1259
        %v1381 = vmul.f32 %v1124, %v1265
        %v1382 = vmul.f32 %v1124, %v1271
        %v1383 = vmul.f32 %v1124, %v1277
        %v1384 = vmul.f32 %v1125, %v1284
        %v1385 = vmul.f32 %v1125, %v1290
        %v1386 = vmul.f32 %v1125, %v1296
        %v1387 = vmul.f32 %v1125, %v1302
        %v1388 = vmul.f32 %v1126, %v1309
        %v1389 = vmul.f32 %v1126, %v1315
        %v1390 = vmul.f32 %v1126, %v1321
        %v1391 = vmul.f32 %v1126, %v1327
        %v1392 = vadd.f32 %v1079, %v1360
        %v1393 = vadd.f32 %v1080, %v1361
        %v1394 = vadd.f32 %v1081, %v1362
        %v1395 = vadd.f32 %v1082, %v1363
        %v1396 = vadd.f32 %v1083, %v1364
        %v1397 = vadd.f32 %v1084, %v1365
        %v1398 = vadd.f32 %v1085, %v1366
        %v1399 = vadd.f32 %v1086, %v1367
        %v1400 = vadd.f32 %v1087, %v1368
        %v1401 = vadd.f32 %v1088, %v1369
        %v1402 = vadd.f32 %v1089, %v1370
        %v1403 = vadd.f32 %v1090, %v1371
        %v1404 = vadd.f32 %v1091, %v1372
        %v1405 = vadd.f32 %v1092, %v1373
        %v1406 = vadd.f32 %v1093, %v1374
        %v1407 = vadd.f32 %v1094, %v1375
        %v1408 = vadd.f32 %v1095, %v1376
        %v1409 = vadd.f32 %v1096, %v1377
        %v1410 = vadd.f32 %v1097, %v1378
        %v1411 = vadd.f32 %v1098, %v1379
        %v1412 = vadd.f32 %v1099, %v1380
        %v1413 = vadd.f32 %v1100, %v1381
        %v1414 = vadd.f32 %v1101, %v1382
        %v1415 = vadd.f32 %v1102, %v1383
        %v1416 = vadd.f32 %v1103, %v1384
        %v1417 = vadd.f32 %v1104, %v1385
        %v1418 = vadd.f32 %v1105, %v1386
        %v1419 = vadd.f32 %v1106, %v1387
        %v1420 = vadd.f32 %v1107, %v1388
        %v1421 = vadd.f32 %v1108, %v1389
        %v1422 = vadd.f32 %v1109, %v1390
        %v1423 = vadd.f32 %v1110, %v1391
        %1456 = vset.pattern.permute.xlu0 0
        %1457 = vperm.xlu0 %1456, %v1392
        %v1458 = vpop.permute.xlu0 %1457
        %1459 = vset.pattern.permute.xlu0 0
        %1460 = vperm.xlu0 %1459, %v1393
        %v1461 = vpop.permute.xlu0 %1460
        %1462 = vset.pattern.permute.xlu0 0
        %1463 = vperm.xlu0 %1462, %v1394
        %v1464 = vpop.permute.xlu0 %1463
        %1465 = vset.pattern.permute.xlu0 0
        %1466 = vperm.xlu0 %1465, %v1395
        %v1467 = vpop.permute.xlu0 %1466
        %1468 = vset.pattern.permute.xlu0 0
        %1469 = vperm.xlu0 %1468, %v1396
        %v1470 = vpop.permute.xlu0 %1469
        %1471 = vset.pattern.permute.xlu0 0
        %1472 = vperm.xlu0 %1471, %v1397
        %v1473 = vpop.permute.xlu0 %1472
        %1474 = vset.pattern.permute.xlu0 0
        %1475 = vperm.xlu0 %1474, %v1398
        %v1476 = vpop.permute.xlu0 %1475
        %1477 = vset.pattern.permute.xlu0 0
        %1478 = vperm.xlu0 %1477, %v1399
        %v1479 = vpop.permute.xlu0 %1478
        %1480 = vset.pattern.permute.xlu0 0
        %1481 = vperm.xlu0 %1480, %v1400
        %v1482 = vpop.permute.xlu0 %1481
        %1483 = vset.pattern.permute.xlu0 0
        %1484 = vperm.xlu0 %1483, %v1401
        %v1485 = vpop.permute.xlu0 %1484
        %1486 = vset.pattern.permute.xlu0 0
        %1487 = vperm.xlu0 %1486, %v1402
        %v1488 = vpop.permute.xlu0 %1487
        %1489 = vset.pattern.permute.xlu0 0
        %1490 = vperm.xlu0 %1489, %v1403
        %v1491 = vpop.permute.xlu0 %1490
        %1492 = vset.pattern.permute.xlu0 0
        %1493 = vperm.xlu0 %1492, %v1404
        %v1494 = vpop.permute.xlu0 %1493
        %1495 = vset.pattern.permute.xlu0 0
        %1496 = vperm.xlu0 %1495, %v1405
        %v1497 = vpop.permute.xlu0 %1496
        %1498 = vset.pattern.permute.xlu0 0
        %1499 = vperm.xlu0 %1498, %v1406
        %v1500 = vpop.permute.xlu0 %1499
        %1501 = vset.pattern.permute.xlu0 0
        %1502 = vperm.xlu0 %1501, %v1407
        %v1503 = vpop.permute.xlu0 %1502
        %1504 = vset.pattern.permute.xlu0 0
        %1505 = vperm.xlu0 %1504, %v1408
        %v1506 = vpop.permute.xlu0 %1505
        %1507 = vset.pattern.permute.xlu0 0
        %1508 = vperm.xlu0 %1507, %v1409
        %v1509 = vpop.permute.xlu0 %1508
        %1510 = vset.pattern.permute.xlu0 0
        %1511 = vperm.xlu0 %1510, %v1410
        %v1512 = vpop.permute.xlu0 %1511
        %1513 = vset.pattern.permute.xlu0 0
        %1514 = vperm.xlu0 %1513, %v1411
        %v1515 = vpop.permute.xlu0 %1514
        %1516 = vset.pattern.permute.xlu0 0
        %1517 = vperm.xlu0 %1516, %v1412
        %v1518 = vpop.permute.xlu0 %1517
        %1519 = vset.pattern.permute.xlu0 0
        %1520 = vperm.xlu0 %1519, %v1413
        %v1521 = vpop.permute.xlu0 %1520
        %1522 = vset.pattern.permute.xlu0 0
        %1523 = vperm.xlu0 %1522, %v1414
        %v1524 = vpop.permute.xlu0 %1523
        %1525 = vset.pattern.permute.xlu0 0
        %1526 = vperm.xlu0 %1525, %v1415
        %v1527 = vpop.permute.xlu0 %1526
        %1528 = vset.pattern.permute.xlu0 0
        %1529 = vperm.xlu0 %1528, %v1416
        %v1530 = vpop.permute.xlu0 %1529
        %1531 = vset.pattern.permute.xlu0 0
        %1532 = vperm.xlu0 %1531, %v1417
        %v1533 = vpop.permute.xlu0 %1532
        %1534 = vset.pattern.permute.xlu0 0
        %1535 = vperm.xlu0 %1534, %v1418
        %v1536 = vpop.permute.xlu0 %1535
        %1537 = vset.pattern.permute.xlu0 0
        %1538 = vperm.xlu0 %1537, %v1419
        %v1539 = vpop.permute.xlu0 %1538
        %1540 = vset.pattern.permute.xlu0 0
        %1541 = vperm.xlu0 %1540, %v1420
        %v1542 = vpop.permute.xlu0 %1541
        %1543 = vset.pattern.permute.xlu0 0
        %1544 = vperm.xlu0 %1543, %v1421
        %v1545 = vpop.permute.xlu0 %1544
        %1546 = vset.pattern.permute.xlu0 0
        %1547 = vperm.xlu0 %1546, %v1422
        %v1548 = vpop.permute.xlu0 %1547
        %1549 = vset.pattern.permute.xlu0 0
        %1550 = vperm.xlu0 %1549, %v1423
        %v1551 = vpop.permute.xlu0 %1550
        %v1552 = vperm.slane %v1458, %v512
        %v1553 = vadd.s32 %v512, 4294967288
        %v1554 = vperm.slane %v1461, %v1553
        %vm1555 = vcmask 130112
        %v1556 = vsel %vm1555, %v1554, %v1552
        %v1557 = vadd.s32 %v512, 4294967280
        %v1558 = vperm.slane %v1464, %v1557
        %vm1559 = vcmask 195712
        %v1560 = vsel %vm1559, %v1558, %v1556
        %v1561 = vadd.s32 %v512, 4294967272
        %v1562 = vperm.slane %v1467, %v1561
        %vm1563 = vcmask 261312
        %v1564 = vsel %vm1563, %v1562, %v1560
        %v1565 = vperm.slane %v1470, %v512
        %v1566 = vperm.slane %v1473, %v1553
        %v1567 = vsel %vm1555, %v1566, %v1565
        %v1568 = vperm.slane %v1476, %v1557
        %v1569 = vsel %vm1559, %v1568, %v1567
        %v1570 = vperm.slane %v1479, %v1561
        %v1571 = vsel %vm1563, %v1570, %v1569
        %v1572 = vperm.slane %v1482, %v512
        %v1573 = vperm.slane %v1485, %v1553
        %v1574 = vsel %vm1555, %v1573, %v1572
        %v1575 = vperm.slane %v1488, %v1557
        %v1576 = vsel %vm1559, %v1575, %v1574
        %v1577 = vperm.slane %v1491, %v1561
        %v1578 = vsel %vm1563, %v1577, %v1576
        %v1579 = vperm.slane %v1494, %v512
        %v1580 = vperm.slane %v1497, %v1553
        %v1581 = vsel %vm1555, %v1580, %v1579
        %v1582 = vperm.slane %v1500, %v1557
        %v1583 = vsel %vm1559, %v1582, %v1581
        %v1584 = vperm.slane %v1503, %v1561
        %v1585 = vsel %vm1563, %v1584, %v1583
        %v1586 = vperm.slane %v1506, %v512
        %v1587 = vperm.slane %v1509, %v1553
        %v1588 = vsel %vm1555, %v1587, %v1586
        %v1589 = vperm.slane %v1512, %v1557
        %v1590 = vsel %vm1559, %v1589, %v1588
        %v1591 = vperm.slane %v1515, %v1561
        %v1592 = vsel %vm1563, %v1591, %v1590
        %v1593 = vperm.slane %v1518, %v512
        %v1594 = vperm.slane %v1521, %v1553
        %v1595 = vsel %vm1555, %v1594, %v1593
        %v1596 = vperm.slane %v1524, %v1557
        %v1597 = vsel %vm1559, %v1596, %v1595
        %v1598 = vperm.slane %v1527, %v1561
        %v1599 = vsel %vm1563, %v1598, %v1597
        %v1600 = vperm.slane %v1530, %v512
        %v1601 = vperm.slane %v1533, %v1553
        %v1602 = vsel %vm1555, %v1601, %v1600
        %v1603 = vperm.slane %v1536, %v1557
        %v1604 = vsel %vm1559, %v1603, %v1602
        %v1605 = vperm.slane %v1539, %v1561
        %v1606 = vsel %vm1563, %v1605, %v1604
        %v1607 = vperm.slane %v1542, %v512
        %v1608 = vperm.slane %v1545, %v1553
        %v1609 = vsel %vm1555, %v1608, %v1607
        %v1610 = vperm.slane %v1548, %v1557
        %v1611 = vsel %vm1559, %v1610, %v1609
        %v1612 = vperm.slane %v1551, %v1561
        %v1613 = vsel %vm1563, %v1612, %v1611
        %v1614 = vsel %vm521, %v1571, %v1564
        %v1615 = vsel %vm523, %v1578, %v1614
        %v1616 = vsel %vm525, %v1585, %v1615
        %v1617 = vsel %vm527, %v1592, %v1616
        %v1618 = vsel %vm529, %v1599, %v1617
        %v1619 = vsel %vm531, %v1606, %v1618
        %v1620 = vsel %vm533, %v1613, %v1619
        %1622 = vst.msk [vmem:[%s376] sm:$0xff] %vm387, %v1620
        %s1623 = sand.u32 %s176, 1
        %s1624 = scalar_lea.sflag [#allocation4], %s1623
        %s1625 = sand.u32 %s176, 1
        %s1626 = smul.addr %s1625, 8
        %s1627 = scalar_lea.vmem [#allocation11], %s1626
        // Predicated region
        $region65: #{tpu_custom_call.1} parent=43 // pred_check
          %p1628 = pneg %p186
        $region66: #{tpu_custom_call.1} parent=43 // pred_check_branch
          %1630 = sbr.rel (%p1628) target = $region68
        $region67: #{tpu_custom_call.1} parent=43 // pred_region
          %1632 = vsyncadd %s1624, 0
          %s1633 = smul.addr %s27, 8
          %s1634 = scalar_lea.hbm %s6, %s1633
          %s1636 = sshll.u32 %s1627, 4
          %s1637 = int_to_ptr.vmem [resolvable:$true] %s1636
          %s1638 = sshll.u32 %s1634, 4
          %s1639 = int_to_ptr.hbm [resolvable:$true] %s1638
          %1641 = dma.vmem_to_hbm [thread:$0]  %s1637, 128, %s1639, %s1624
        $region68: #{tpu_custom_call.1} parent=43 // pred_fallthru
          _
      $region44: #{tpu_custom_call.1} parent=5 // pred_fallthru
        _
      %p1642 = scmp.le.s32.totalorder 2, %s22
      // Predicated region
      $region69: #{tpu_custom_call.1} parent=5 // pred_check
        %p1643 = pneg %p1642
      $region70: #{tpu_custom_call.1} parent=5 // pred_check_branch
        %1645 = sbr.rel (%p1643) target = $region72
      $region71: #{tpu_custom_call.1} parent=5 // pred_region
        %s1646 = ssub.s32 %s22, 2
        // Predicated region
        $region73: #{tpu_custom_call.1} parent=71 // pred_check
          %p1647 = pneg %p192
        $region74: #{tpu_custom_call.1} parent=71 // pred_check_branch
          %1649 = sbr.rel (%p1647) target = $region76
        $region75: #{tpu_custom_call.1} parent=71 // pred_region
          %s1650 = sand.u32 %s177, 1
          %s1651 = scalar_lea.sflag [#allocation4], %s1650
          %s1652 = sand.u32 %s177, 1
          %s1653 = smul.addr %s1652, 8
          %s1654 = scalar_lea.vmem [#allocation11], %s1653
          %1656 = dma.done %s1651, 128
        $region76: #{tpu_custom_call.1} parent=71 // pred_fallthru
          _
      $region72: #{tpu_custom_call.1} parent=5 // pred_fallthru
        _
    $region6: #{tpu_custom_call.1} parent=1 // loop_footer
      %s26 = sadd.s32 1, %s22
    $region7: #{tpu_custom_call.1} parent=1 // loop_footer_branch
      %21 = sbr.rel target = $region3
    $region8: #{tpu_custom_call.1} parent=1 // loop_exit
      _
    %1657 = vsyncpa [#allocation3], 1
    %s1658 = scalar_lea.sflag [#allocation3], 1
    %1659 = vsyncpa %s1658, 1
    %1660 = vsyncpa [#allocation6], 1
    %s1661 = scalar_lea.sflag [#allocation6], 1
    %1662 = vsyncpa %s1661, 1
    %1663 = vsyncpa [#allocation9], 1
    %1664 = vsyncpa [#allocation4], 1
    %s1665 = scalar_lea.sflag [#allocation4], 1
    %1666 = vsyncpa %s1665, 1

</llo_original>
